<compile_context>
chip_gen: v7x
topology: tpu7x:2x2x1
jax: 0.10.0
libtpu: 0.0.40
codegen_flags: <defaults>
</compile_context>

<pallas_src>
import functools

import jax
import jax.numpy as jnp
from jax import lax
from jax.experimental import pallas as pl
from jax.experimental.pallas import tpu as pltpu


def _self_attention_wide_kernel(x_ref, wqkv_ref, wu_ref, bu_ref, o_ref,
                                qkv_scr, h_scr, *, heads, mask, chunk_b):
    b_blk, t, e = x_ref.shape
    m_rows = b_blk * t
    he = heads * e
    cb = chunk_b
    rows = cb * t                      # rows handled per attention iteration
    n_chunks = b_blk // cb

    # ---- single fused, lane-dense QKV projection (bf16 MXU, f32 acc) ----
    # 1/sqrt(e) is already folded into the q columns of wqkv (wrapper).
    xm = x_ref[...].reshape(m_rows, e).astype(jnp.bfloat16)
    qkv_scr[...] = jnp.dot(xm, wqkv_ref[...],
                           preferred_element_type=jnp.float32
                           ).astype(jnp.bfloat16)

    # ---- causal mask hoisted out of all loops ----
    if mask:
        row = lax.broadcasted_iota(jnp.int32, (t, t), 0)
        col = lax.broadcasted_iota(jnp.int32, (t, t), 1)
        future = jnp.broadcast_to((col > row)[None], (cb, t, t))   # i < j

    # ---- attention: static loop over heads, fori-loop over batch chunks ----
    for j in range(heads):
        cq = j * e            # q columns (also h_scr columns for head j)
        ck = he + j * e       # k columns
        cv = 2 * he + j * e   # v columns

        def chunk_body(i, cq=cq, ck=ck, cv=cv):
            r0 = i * rows
            if not isinstance(r0, int):
                r0 = pl.multiple_of(r0, rows)
            q = qkv_scr[pl.ds(r0, rows), cq:cq + e].reshape(cb, t, e)
            k = qkv_scr[pl.ds(r0, rows), ck:ck + e].reshape(cb, t, e)
            v = qkv_scr[pl.ds(r0, rows), cv:cv + e].reshape(cb, t, e)

            # head-batched scores over the whole chunk (no k transpose)
            scores = jnp.einsum('bqd,bkd->bqk', q, k,
                                preferred_element_type=jnp.float32)
            if mask:
                scores = jnp.where(future, -jnp.inf, scores)

            mx = jnp.max(scores, axis=-1, keepdims=True)
            p = jnp.exp(scores - mx)
            denom = jnp.sum(p, axis=-1, keepdims=True)
            attn = p * pl.reciprocal(denom, approx=True)       # EUP vrcp

            out = jnp.einsum('bqk,bkd->bqd', attn.astype(jnp.bfloat16), v,
                             preferred_element_type=jnp.float32)
            # f32 store: avoids bf16 partial-store read-modify-write
            h_scr[pl.ds(r0, rows), cq:cq + e] = out.reshape(rows, e)

        if n_chunks == 1:
            chunk_body(0)
        else:
            def fori_body(i, carry, body=chunk_body):
                body(i)
                return carry
            lax.fori_loop(0, n_chunks, fori_body, 0)

    # ---- single unify-heads matmul over the whole (M, heads*e) slab ----
    out2d = jnp.dot(h_scr[...].astype(jnp.bfloat16), wu_ref[...],
                    preferred_element_type=jnp.float32) + bu_ref[...]
    o_ref[...] = out2d.reshape(b_blk, t, e).astype(o_ref.dtype)


def _num_tensorcores_per_chip():
    """2 on v7x-class parts (two TensorCores/chip), else 1."""
    try:
        kind = jax.devices()[0].device_kind.lower()
    except Exception:
        return 1
    return 2 if "v7" in kind else 1


def _pick_block_b(b, t, *, max_rows=1024, min_rows_multi=256):
    """Largest divisor of b keeping b_blk*t <= max_rows (targets 512-1024
    matmul rows/step to amortize the ~0.35us per-step overhead and fill the
    256-wide MXU M dim; VMEM use stays a few MiB even at 1024 rows, he=256).
    Only on 2-TensorCore parts (v7x) prefer >=2 grid steps so both cores get
    work, as long as each step keeps a healthy (~256) row count."""
    if b <= 1:
        return 1
    divisors = [d for d in range(1, b + 1) if b % d == 0]
    fitting = [d for d in divisors if d * t <= max_rows] or [1]
    b_blk = max(fitting)
    if _num_tensorcores_per_chip() >= 2 and b // b_blk < 2:
        floor_rows = min(min_rows_multi, (b // 2) * t)
        alts = [d for d in fitting if b // d >= 2 and d * t >= floor_rows]
        if alts:
            b_blk = max(alts)
    return b_blk


def _pick_chunk_b(b_blk, t, *, target_rows=128):
    """Divisor of b_blk so each attention loop iteration covers ~128 rows:
    bounds per-iteration vreg live ranges while amortizing the masked
    32-lane column loads/stores over many batch elements."""
    target = max(1, target_rows // max(t, 1))
    best = 1
    for d in range(1, b_blk + 1):
        if b_blk % d == 0 and d <= target:
            best = d
    return best


def self_attention_wide(x, wq, wk, wv, wu, bu, *, heads, mask=False,
                        block_b=None):
    b, t, e = x.shape
    he = heads * e
    assert wq.shape == (e, he) and wk.shape == (e, he) and wv.shape == (e, he)
    assert wu.shape == (he, e) and bu.shape == (1, e)

    b_blk = block_b if block_b is not None else _pick_block_b(b, t)
    assert b % b_blk == 0
    grid_b = b // b_blk
    m_rows = b_blk * t
    chunk_b = _pick_chunk_b(b_blk, t)

    # Fused QKV weight (e, 3*he), bf16 MXU operands; 1/sqrt(e) folded into the
    # q columns BEFORE the bf16 cast (== 1/e**0.25 applied to both q and k).
    inv_sqrt_e = 1.0 / (float(e) ** 0.5)
    wqkv = jnp.concatenate([wq * inv_sqrt_e, wk, wv], axis=1).astype(jnp.bfloat16)
    wu_bf = wu.astype(jnp.bfloat16)
    bu_f32 = bu.astype(jnp.float32)

    kernel = functools.partial(_self_attention_wide_kernel,
                               heads=heads, mask=mask, chunk_b=chunk_b)
    return pl.pallas_call(
        kernel,
        out_shape=jax.ShapeDtypeStruct((b, t, e), x.dtype),
        grid=(grid_b,),
        in_specs=[
            pl.BlockSpec((b_blk, t, e), lambda i: (i, 0, 0)),     # x block
            pl.BlockSpec((e, 3 * he), lambda i: (0, 0)),          # wq|wk|wv bf16
            pl.BlockSpec((he, e), lambda i: (0, 0)),              # wu bf16
            pl.BlockSpec((1, e), lambda i: (0, 0)),               # bu f32
        ],
        out_specs=pl.BlockSpec((b_blk, t, e), lambda i: (i, 0, 0)),
        scratch_shapes=[
            pltpu.VMEM((m_rows, 3 * he), jnp.bfloat16),   # fused q|k|v
            pltpu.VMEM((m_rows, he), jnp.float32),        # gathered head outs
        ],
        compiler_params=pltpu.CompilerParams(
            dimension_semantics=("parallel",)),
    )(x, wqkv, wu_bf, bu_f32)


def _reference(x, wq, wk, wv, wu, bu, *, heads, mask=False):
    """Pure-JAX (f32) mirror of the PyTorch forward for verification."""
    b, t, e = x.shape
    h = heads
    keys = (x @ wk).reshape(b, t, h, e)
    queries = (x @ wq).reshape(b, t, h, e)
    values = (x @ wv).reshape(b, t, h, e)
    keys = jnp.transpose(keys, (0, 2, 1, 3)).reshape(b * h, t, e)
    queries = jnp.transpose(queries, (0, 2, 1, 3)).reshape(b * h, t, e)
    values = jnp.transpose(values, (0, 2, 1, 3)).reshape(b * h, t, e)
    queries = queries / e ** 0.25
    keys = keys / e ** 0.25
    dot = jnp.einsum('bqe,bke->bqk', queries, keys)
    if mask:
        row = lax.broadcasted_iota(jnp.int32, (t, t), 0)
        col = lax.broadcasted_iota(jnp.int32, (t, t), 1)
        dot = jnp.where((col > row)[None], -jnp.inf, dot)
    dot = jax.nn.softmax(dot, axis=2)
    out = jnp.einsum('bqk,bke->bqe', dot, values).reshape(b, h, t, e)
    out = jnp.transpose(out, (0, 2, 1, 3)).reshape(b, t, h * e)
    return out @ wu + bu[0]


if __name__ == "__main__":
    def check(b, t, e, heads, mask, block_b=None):
        kx, kq, kk, kv, ku, kb = jax.random.split(jax.random.PRNGKey(0), 6)
        x = jax.random.normal(kx, (b, t, e), dtype=jnp.float32)
        wq = jax.random.normal(kq, (e, heads * e), dtype=jnp.float32) * 0.05
        wk = jax.random.normal(kk, (e, heads * e), dtype=jnp.float32) * 0.05
        wv = jax.random.normal(kv, (e, heads * e), dtype=jnp.float32) * 0.05
        wu = jax.random.normal(ku, (heads * e, e), dtype=jnp.float32) * 0.05
        bu = jax.random.normal(kb, (1, e), dtype=jnp.float32) * 0.05

        out = self_attention_wide(x, wq, wk, wv, wu, bu, heads=heads,
                                  mask=mask, block_b=block_b)
        out = jax.block_until_ready(out)
        ref = _reference(x, wq, wk, wv, wu, bu, heads=heads, mask=mask)
        assert out.shape == (b, t, e)
        # Tolerance loosened vs pure-f32 reference: bf16 MXU operands with
        # f32 accumulation + f32 softmax (approx EUP reciprocal).
        assert jnp.allclose(out, ref, atol=2e-2, rtol=2e-2), (
            f"mismatch b={b} t={t} e={e} heads={heads} "
            f"mask={mask} block_b={block_b}")

    # Small shapes implied by the module: batch=2, seq=8, emb=32, heads=8.
    check(2, 8, 32, 8, mask=False)
    check(2, 8, 32, 8, mask=True)
    # Exercise the grid>1 path explicitly.
    check(2, 8, 32, 8, mask=True, block_b=1)
    # Exercise the chunked fori-loop attention path (n_chunks > 1).
    check(64, 8, 32, 8, mask=True)

    print("KERNEL_OK")
</pallas_src>

<mosaic_0001>
module attributes {stable_mosaic.version = 11 : i64} {
  func.func @_self_attention_wide_kernel(%arg0: i32, %arg1: memref<2x8x32xf32, #tpu.memory_space<vmem>>, %arg2: memref<32x768xbf16, #tpu.memory_space<vmem>>, %arg3: memref<256x32xbf16, #tpu.memory_space<vmem>>, %arg4: memref<1x32xf32, #tpu.memory_space<vmem>>, %arg5: memref<2x8x32xf32, #tpu.memory_space<vmem>>, %arg6: memref<16x768xbf16, #tpu.memory_space<vmem>>, %arg7: memref<16x256xf32, #tpu.memory_space<vmem>>) attributes {dimension_semantics = [#tpu.dimension_semantics<parallel>], iteration_bounds = array<i64: 1>, scalar_prefetch = 0 : i64, scratch_operands = 2 : i64, tpu.core_type = #tpu.core_type<tc>, window_params = [{transform_indices = @transform_0, window_bounds = array<i64: 2, 8, 32>}, {pipeline_mode = #tpu.pipeline_mode<synchronous>, transform_indices = @transform_1, window_bounds = array<i64: 32, 768>}, {pipeline_mode = #tpu.pipeline_mode<synchronous>, transform_indices = @transform_2, window_bounds = array<i64: 256, 32>}, {pipeline_mode = #tpu.pipeline_mode<synchronous>, transform_indices = @transform_3, window_bounds = array<i64: 1, 32>}, {transform_indices = @transform_4, window_bounds = array<i64: 2, 8, 32>}]} {
    %c0 = arith.constant 0 : index
    %c0_0 = arith.constant 0 : index
    %c0_1 = arith.constant 0 : index
    %0 = vector.load %arg1[%c0, %c0_0, %c0_1] : memref<2x8x32xf32, #tpu.memory_space<vmem>>, vector<2x8x32xf32>
    %1 = vector.shape_cast %0 : vector<2x8x32xf32> to vector<16x32xf32>
    %2 = arith.truncf %1 : vector<16x32xf32> to vector<16x32xbf16>
    %c0_2 = arith.constant 0 : index
    %c0_3 = arith.constant 0 : index
    %3 = vector.load %arg2[%c0_2, %c0_3] : memref<32x768xbf16, #tpu.memory_space<vmem>>, vector<32x768xbf16>
    %cst = arith.constant dense<0.000000e+00> : vector<16x768xf32>
    %4 = tpu.matmul %2, %3, %cst {dimension_numbers = #tpu.dot_dimension_numbers<[1], [0], [0], [1], [0, 0, 1, 1], [], []>} : vector<16x32xbf16>, vector<32x768xbf16>, vector<16x768xf32> -> vector<16x768xf32>
    %5 = arith.truncf %4 : vector<16x768xf32> to vector<16x768xbf16>
    %c0_4 = arith.constant 0 : index
    %c0_5 = arith.constant 0 : index
    %6 = vector.load %arg6[%c0_4, %c0_5] : memref<16x768xbf16, #tpu.memory_space<vmem>>, vector<16x768xbf16>
    tpu.vector_store %arg6[%c0_4, %c0_5], %5 {strides = array<i32>} : memref<16x768xbf16, #tpu.memory_space<vmem>>, vector<16x768xbf16>,
    %c0_6 = arith.constant 0 : index
    %c0_7 = arith.constant 0 : index
    %7 = vector.load %arg6[%c0_6, %c0_7] : memref<16x768xbf16, #tpu.memory_space<vmem>>, vector<16x32xbf16>
    %8 = vector.shape_cast %7 : vector<16x32xbf16> to vector<2x8x32xbf16>
    %c0_8 = arith.constant 0 : index
    %c256 = arith.constant 256 : index
    %9 = vector.load %arg6[%c0_8, %c256] : memref<16x768xbf16, #tpu.memory_space<vmem>>, vector<16x32xbf16>
    %10 = vector.shape_cast %9 : vector<16x32xbf16> to vector<2x8x32xbf16>
    %c0_9 = arith.constant 0 : index
    %c512 = arith.constant 512 : index
    %11 = vector.load %arg6[%c0_9, %c512] : memref<16x768xbf16, #tpu.memory_space<vmem>>, vector<16x32xbf16>
    %12 = vector.shape_cast %11 : vector<16x32xbf16> to vector<2x8x32xbf16>
    "tpu.trace_start"() <{level = 10 : i32, message = "bqd,bkd->bqk"}> : () -> ()
    %cst_10 = arith.constant dense<0.000000e+00> : vector<2x8x8xf32>
    %13 = tpu.matmul %8, %10, %cst_10 {dimension_numbers = #tpu.dot_dimension_numbers<[2], [2], [1], [1], [0, 0, 0, 1, 1, 1], [0], [0]>} : vector<2x8x32xbf16>, vector<2x8x32xbf16>, vector<2x8x8xf32> -> vector<2x8x8xf32>
    "tpu.trace_stop"() : () -> ()
    %cst_11 = arith.constant dense<0xFF800000> : vector<2x8xf32>
    %14 = vector.multi_reduction <maximumf>, %13, %cst_11 [2] : vector<2x8x8xf32> to vector<2x8xf32>
    %15 = vector.shape_cast %14 : vector<2x8xf32> to vector<2x8x1xf32>
    %16 = vector.broadcast %15 : vector<2x8x1xf32> to vector<2x8x8xf32>
    %17 = arith.subf %13, %16 : vector<2x8x8xf32>
    %18 = math.exp %17 : vector<2x8x8xf32>
    %cst_12 = arith.constant dense<0.000000e+00> : vector<2x8xf32>
    %19 = vector.multi_reduction <add>, %18, %cst_12 [2] : vector<2x8x8xf32> to vector<2x8xf32>
    %20 = vector.shape_cast %19 : vector<2x8xf32> to vector<2x8x1xf32>
    %21 = tpu.reciprocal %20 {approx = true} : vector<2x8x1xf32> -> vector<2x8x1xf32>
    %22 = vector.broadcast %21 : vector<2x8x1xf32> to vector<2x8x8xf32>
    %23 = arith.mulf %18, %22 : vector<2x8x8xf32>
    %24 = arith.truncf %23 : vector<2x8x8xf32> to vector<2x8x8xbf16>
    "tpu.trace_start"() <{level = 10 : i32, message = "bqk,bkd->bqd"}> : () -> ()
    %cst_13 = arith.constant dense<0.000000e+00> : vector<2x8x32xf32>
    %25 = tpu.matmul %24, %12, %cst_13 {dimension_numbers = #tpu.dot_dimension_numbers<[2], [1], [1], [2], [0, 0, 0, 1, 1, 2], [0], [0]>} : vector<2x8x8xbf16>, vector<2x8x32xbf16>, vector<2x8x32xf32> -> vector<2x8x32xf32>
    "tpu.trace_stop"() : () -> ()
    %26 = vector.shape_cast %25 : vector<2x8x32xf32> to vector<16x32xf32>
    %c0_14 = arith.constant 0 : index
    %c0_15 = arith.constant 0 : index
    %27 = vector.load %arg7[%c0_14, %c0_15] : memref<16x256xf32, #tpu.memory_space<vmem>>, vector<16x32xf32>
    tpu.vector_store %arg7[%c0_14, %c0_15], %26 {strides = array<i32>} : memref<16x256xf32, #tpu.memory_space<vmem>>, vector<16x32xf32>,
    %c0_16 = arith.constant 0 : index
    %c32 = arith.constant 32 : index
    %28 = vector.load %arg6[%c0_16, %c32] : memref<16x768xbf16, #tpu.memory_space<vmem>>, vector<16x32xbf16>
    %29 = vector.shape_cast %28 : vector<16x32xbf16> to vector<2x8x32xbf16>
    %c0_17 = arith.constant 0 : index
    %c288 = arith.constant 288 : index
    %30 = vector.load %arg6[%c0_17, %c288] : memref<16x768xbf16, #tpu.memory_space<vmem>>, vector<16x32xbf16>
    %31 = vector.shape_cast %30 : vector<16x32xbf16> to vector<2x8x32xbf16>
    %c0_18 = arith.constant 0 : index
    %c544 = arith.constant 544 : index
    %32 = vector.load %arg6[%c0_18, %c544] : memref<16x768xbf16, #tpu.memory_space<vmem>>, vector<16x32xbf16>
    %33 = vector.shape_cast %32 : vector<16x32xbf16> to vector<2x8x32xbf16>
    "tpu.trace_start"() <{level = 10 : i32, message = "bqd,bkd->bqk"}> : () -> ()
    %cst_19 = arith.constant dense<0.000000e+00> : vector<2x8x8xf32>
    %34 = tpu.matmul %29, %31, %cst_19 {dimension_numbers = #tpu.dot_dimension_numbers<[2], [2], [1], [1], [0, 0, 0, 1, 1, 1], [0], [0]>} : vector<2x8x32xbf16>, vector<2x8x32xbf16>, vector<2x8x8xf32> -> vector<2x8x8xf32>
    "tpu.trace_stop"() : () -> ()
    %cst_20 = arith.constant dense<0xFF800000> : vector<2x8xf32>
    %35 = vector.multi_reduction <maximumf>, %34, %cst_20 [2] : vector<2x8x8xf32> to vector<2x8xf32>
    %36 = vector.shape_cast %35 : vector<2x8xf32> to vector<2x8x1xf32>
    %37 = vector.broadcast %36 : vector<2x8x1xf32> to vector<2x8x8xf32>
    %38 = arith.subf %34, %37 : vector<2x8x8xf32>
    %39 = math.exp %38 : vector<2x8x8xf32>
    %cst_21 = arith.constant dense<0.000000e+00> : vector<2x8xf32>
    %40 = vector.multi_reduction <add>, %39, %cst_21 [2] : vector<2x8x8xf32> to vector<2x8xf32>
    %41 = vector.shape_cast %40 : vector<2x8xf32> to vector<2x8x1xf32>
    %42 = tpu.reciprocal %41 {approx = true} : vector<2x8x1xf32> -> vector<2x8x1xf32>
    %43 = vector.broadcast %42 : vector<2x8x1xf32> to vector<2x8x8xf32>
    %44 = arith.mulf %39, %43 : vector<2x8x8xf32>
    %45 = arith.truncf %44 : vector<2x8x8xf32> to vector<2x8x8xbf16>
    "tpu.trace_start"() <{level = 10 : i32, message = "bqk,bkd->bqd"}> : () -> ()
    %cst_22 = arith.constant dense<0.000000e+00> : vector<2x8x32xf32>
    %46 = tpu.matmul %45, %33, %cst_22 {dimension_numbers = #tpu.dot_dimension_numbers<[2], [1], [1], [2], [0, 0, 0, 1, 1, 2], [0], [0]>} : vector<2x8x8xbf16>, vector<2x8x32xbf16>, vector<2x8x32xf32> -> vector<2x8x32xf32>
    "tpu.trace_stop"() : () -> ()
    %47 = vector.shape_cast %46 : vector<2x8x32xf32> to vector<16x32xf32>
    %c0_23 = arith.constant 0 : index
    %c32_24 = arith.constant 32 : index
    %48 = vector.load %arg7[%c0_23, %c32_24] : memref<16x256xf32, #tpu.memory_space<vmem>>, vector<16x32xf32>
    tpu.vector_store %arg7[%c0_23, %c32_24], %47 {strides = array<i32>} : memref<16x256xf32, #tpu.memory_space<vmem>>, vector<16x32xf32>,
    %c0_25 = arith.constant 0 : index
    %c64 = arith.constant 64 : index
    %49 = vector.load %arg6[%c0_25, %c64] : memref<16x768xbf16, #tpu.memory_space<vmem>>, vector<16x32xbf16>
    %50 = vector.shape_cast %49 : vector<16x32xbf16> to vector<2x8x32xbf16>
    %c0_26 = arith.constant 0 : index
    %c320 = arith.constant 320 : index
    %51 = vector.load %arg6[%c0_26, %c320] : memref<16x768xbf16, #tpu.memory_space<vmem>>, vector<16x32xbf16>
    %52 = vector.shape_cast %51 : vector<16x32xbf16> to vector<2x8x32xbf16>
    %c0_27 = arith.constant 0 : index
    %c576 = arith.constant 576 : index
    %53 = vector.load %arg6[%c0_27, %c576] : memref<16x768xbf16, #tpu.memory_space<vmem>>, vector<16x32xbf16>
    %54 = vector.shape_cast %53 : vector<16x32xbf16> to vector<2x8x32xbf16>
    "tpu.trace_start"() <{level = 10 : i32, message = "bqd,bkd->bqk"}> : () -> ()
    %cst_28 = arith.constant dense<0.000000e+00> : vector<2x8x8xf32>
    %55 = tpu.matmul %50, %52, %cst_28 {dimension_numbers = #tpu.dot_dimension_numbers<[2], [2], [1], [1], [0, 0, 0, 1, 1, 1], [0], [0]>} : vector<2x8x32xbf16>, vector<2x8x32xbf16>, vector<2x8x8xf32> -> vector<2x8x8xf32>
    "tpu.trace_stop"() : () -> ()
    %cst_29 = arith.constant dense<0xFF800000> : vector<2x8xf32>
    %56 = vector.multi_reduction <maximumf>, %55, %cst_29 [2] : vector<2x8x8xf32> to vector<2x8xf32>
    %57 = vector.shape_cast %56 : vector<2x8xf32> to vector<2x8x1xf32>
    %58 = vector.broadcast %57 : vector<2x8x1xf32> to vector<2x8x8xf32>
    %59 = arith.subf %55, %58 : vector<2x8x8xf32>
    %60 = math.exp %59 : vector<2x8x8xf32>
    %cst_30 = arith.constant dense<0.000000e+00> : vector<2x8xf32>
    %61 = vector.multi_reduction <add>, %60, %cst_30 [2] : vector<2x8x8xf32> to vector<2x8xf32>
    %62 = vector.shape_cast %61 : vector<2x8xf32> to vector<2x8x1xf32>
    %63 = tpu.reciprocal %62 {approx = true} : vector<2x8x1xf32> -> vector<2x8x1xf32>
    %64 = vector.broadcast %63 : vector<2x8x1xf32> to vector<2x8x8xf32>
    %65 = arith.mulf %60, %64 : vector<2x8x8xf32>
    %66 = arith.truncf %65 : vector<2x8x8xf32> to vector<2x8x8xbf16>
    "tpu.trace_start"() <{level = 10 : i32, message = "bqk,bkd->bqd"}> : () -> ()
    %cst_31 = arith.constant dense<0.000000e+00> : vector<2x8x32xf32>
    %67 = tpu.matmul %66, %54, %cst_31 {dimension_numbers = #tpu.dot_dimension_numbers<[2], [1], [1], [2], [0, 0, 0, 1, 1, 2], [0], [0]>} : vector<2x8x8xbf16>, vector<2x8x32xbf16>, vector<2x8x32xf32> -> vector<2x8x32xf32>
    "tpu.trace_stop"() : () -> ()
    %68 = vector.shape_cast %67 : vector<2x8x32xf32> to vector<16x32xf32>
    %c0_32 = arith.constant 0 : index
    %c64_33 = arith.constant 64 : index
    %69 = vector.load %arg7[%c0_32, %c64_33] : memref<16x256xf32, #tpu.memory_space<vmem>>, vector<16x32xf32>
    tpu.vector_store %arg7[%c0_32, %c64_33], %68 {strides = array<i32>} : memref<16x256xf32, #tpu.memory_space<vmem>>, vector<16x32xf32>,
    %c0_34 = arith.constant 0 : index
    %c96 = arith.constant 96 : index
    %70 = vector.load %arg6[%c0_34, %c96] : memref<16x768xbf16, #tpu.memory_space<vmem>>, vector<16x32xbf16>
    %71 = vector.shape_cast %70 : vector<16x32xbf16> to vector<2x8x32xbf16>
    %c0_35 = arith.constant 0 : index
    %c352 = arith.constant 352 : index
    %72 = vector.load %arg6[%c0_35, %c352] : memref<16x768xbf16, #tpu.memory_space<vmem>>, vector<16x32xbf16>
    %73 = vector.shape_cast %72 : vector<16x32xbf16> to vector<2x8x32xbf16>
    %c0_36 = arith.constant 0 : index
    %c608 = arith.constant 608 : index
    %74 = vector.load %arg6[%c0_36, %c608] : memref<16x768xbf16, #tpu.memory_space<vmem>>, vector<16x32xbf16>
    %75 = vector.shape_cast %74 : vector<16x32xbf16> to vector<2x8x32xbf16>
    "tpu.trace_start"() <{level = 10 : i32, message = "bqd,bkd->bqk"}> : () -> ()
    %cst_37 = arith.constant dense<0.000000e+00> : vector<2x8x8xf32>
    %76 = tpu.matmul %71, %73, %cst_37 {dimension_numbers = #tpu.dot_dimension_numbers<[2], [2], [1], [1], [0, 0, 0, 1, 1, 1], [0], [0]>} : vector<2x8x32xbf16>, vector<2x8x32xbf16>, vector<2x8x8xf32> -> vector<2x8x8xf32>
    "tpu.trace_stop"() : () -> ()
    %cst_38 = arith.constant dense<0xFF800000> : vector<2x8xf32>
    %77 = vector.multi_reduction <maximumf>, %76, %cst_38 [2] : vector<2x8x8xf32> to vector<2x8xf32>
    %78 = vector.shape_cast %77 : vector<2x8xf32> to vector<2x8x1xf32>
    %79 = vector.broadcast %78 : vector<2x8x1xf32> to vector<2x8x8xf32>
    %80 = arith.subf %76, %79 : vector<2x8x8xf32>
    %81 = math.exp %80 : vector<2x8x8xf32>
    %cst_39 = arith.constant dense<0.000000e+00> : vector<2x8xf32>
    %82 = vector.multi_reduction <add>, %81, %cst_39 [2] : vector<2x8x8xf32> to vector<2x8xf32>
    %83 = vector.shape_cast %82 : vector<2x8xf32> to vector<2x8x1xf32>
    %84 = tpu.reciprocal %83 {approx = true} : vector<2x8x1xf32> -> vector<2x8x1xf32>
    %85 = vector.broadcast %84 : vector<2x8x1xf32> to vector<2x8x8xf32>
    %86 = arith.mulf %81, %85 : vector<2x8x8xf32>
    %87 = arith.truncf %86 : vector<2x8x8xf32> to vector<2x8x8xbf16>
    "tpu.trace_start"() <{level = 10 : i32, message = "bqk,bkd->bqd"}> : () -> ()
    %cst_40 = arith.constant dense<0.000000e+00> : vector<2x8x32xf32>
    %88 = tpu.matmul %87, %75, %cst_40 {dimension_numbers = #tpu.dot_dimension_numbers<[2], [1], [1], [2], [0, 0, 0, 1, 1, 2], [0], [0]>} : vector<2x8x8xbf16>, vector<2x8x32xbf16>, vector<2x8x32xf32> -> vector<2x8x32xf32>
    "tpu.trace_stop"() : () -> ()
    %89 = vector.shape_cast %88 : vector<2x8x32xf32> to vector<16x32xf32>
    %c0_41 = arith.constant 0 : index
    %c96_42 = arith.constant 96 : index
    %90 = vector.load %arg7[%c0_41, %c96_42] : memref<16x256xf32, #tpu.memory_space<vmem>>, vector<16x32xf32>
    tpu.vector_store %arg7[%c0_41, %c96_42], %89 {strides = array<i32>} : memref<16x256xf32, #tpu.memory_space<vmem>>, vector<16x32xf32>,
    %c0_43 = arith.constant 0 : index
    %c128 = arith.constant 128 : index
    %91 = vector.load %arg6[%c0_43, %c128] : memref<16x768xbf16, #tpu.memory_space<vmem>>, vector<16x32xbf16>
    %92 = vector.shape_cast %91 : vector<16x32xbf16> to vector<2x8x32xbf16>
    %c0_44 = arith.constant 0 : index
    %c384 = arith.constant 384 : index
    %93 = vector.load %arg6[%c0_44, %c384] : memref<16x768xbf16, #tpu.memory_space<vmem>>, vector<16x32xbf16>
    %94 = vector.shape_cast %93 : vector<16x32xbf16> to vector<2x8x32xbf16>
    %c0_45 = arith.constant 0 : index
    %c640 = arith.constant 640 : index
    %95 = vector.load %arg6[%c0_45, %c640] : memref<16x768xbf16, #tpu.memory_space<vmem>>, vector<16x32xbf16>
    %96 = vector.shape_cast %95 : vector<16x32xbf16> to vector<2x8x32xbf16>
    "tpu.trace_start"() <{level = 10 : i32, message = "bqd,bkd->bqk"}> : () -> ()
    %cst_46 = arith.constant dense<0.000000e+00> : vector<2x8x8xf32>
    %97 = tpu.matmul %92, %94, %cst_46 {dimension_numbers = #tpu.dot_dimension_numbers<[2], [2], [1], [1], [0, 0, 0, 1, 1, 1], [0], [0]>} : vector<2x8x32xbf16>, vector<2x8x32xbf16>, vector<2x8x8xf32> -> vector<2x8x8xf32>
    "tpu.trace_stop"() : () -> ()
    %cst_47 = arith.constant dense<0xFF800000> : vector<2x8xf32>
    %98 = vector.multi_reduction <maximumf>, %97, %cst_47 [2] : vector<2x8x8xf32> to vector<2x8xf32>
    %99 = vector.shape_cast %98 : vector<2x8xf32> to vector<2x8x1xf32>
    %100 = vector.broadcast %99 : vector<2x8x1xf32> to vector<2x8x8xf32>
    %101 = arith.subf %97, %100 : vector<2x8x8xf32>
    %102 = math.exp %101 : vector<2x8x8xf32>
    %cst_48 = arith.constant dense<0.000000e+00> : vector<2x8xf32>
    %103 = vector.multi_reduction <add>, %102, %cst_48 [2] : vector<2x8x8xf32> to vector<2x8xf32>
    %104 = vector.shape_cast %103 : vector<2x8xf32> to vector<2x8x1xf32>
    %105 = tpu.reciprocal %104 {approx = true} : vector<2x8x1xf32> -> vector<2x8x1xf32>
    %106 = vector.broadcast %105 : vector<2x8x1xf32> to vector<2x8x8xf32>
    %107 = arith.mulf %102, %106 : vector<2x8x8xf32>
    %108 = arith.truncf %107 : vector<2x8x8xf32> to vector<2x8x8xbf16>
    "tpu.trace_start"() <{level = 10 : i32, message = "bqk,bkd->bqd"}> : () -> ()
    %cst_49 = arith.constant dense<0.000000e+00> : vector<2x8x32xf32>
    %109 = tpu.matmul %108, %96, %cst_49 {dimension_numbers = #tpu.dot_dimension_numbers<[2], [1], [1], [2], [0, 0, 0, 1, 1, 2], [0], [0]>} : vector<2x8x8xbf16>, vector<2x8x32xbf16>, vector<2x8x32xf32> -> vector<2x8x32xf32>
    "tpu.trace_stop"() : () -> ()
    %110 = vector.shape_cast %109 : vector<2x8x32xf32> to vector<16x32xf32>
    %c0_50 = arith.constant 0 : index
    %c128_51 = arith.constant 128 : index
    %111 = vector.load %arg7[%c0_50, %c128_51] : memref<16x256xf32, #tpu.memory_space<vmem>>, vector<16x32xf32>
    tpu.vector_store %arg7[%c0_50, %c128_51], %110 {strides = array<i32>} : memref<16x256xf32, #tpu.memory_space<vmem>>, vector<16x32xf32>,
    %c0_52 = arith.constant 0 : index
    %c160 = arith.constant 160 : index
    %112 = vector.load %arg6[%c0_52, %c160] : memref<16x768xbf16, #tpu.memory_space<vmem>>, vector<16x32xbf16>
    %113 = vector.shape_cast %112 : vector<16x32xbf16> to vector<2x8x32xbf16>
    %c0_53 = arith.constant 0 : index
    %c416 = arith.constant 416 : index
    %114 = vector.load %arg6[%c0_53, %c416] : memref<16x768xbf16, #tpu.memory_space<vmem>>, vector<16x32xbf16>
    %115 = vector.shape_cast %114 : vector<16x32xbf16> to vector<2x8x32xbf16>
    %c0_54 = arith.constant 0 : index
    %c672 = arith.constant 672 : index
    %116 = vector.load %arg6[%c0_54, %c672] : memref<16x768xbf16, #tpu.memory_space<vmem>>, vector<16x32xbf16>
    %117 = vector.shape_cast %116 : vector<16x32xbf16> to vector<2x8x32xbf16>
    "tpu.trace_start"() <{level = 10 : i32, message = "bqd,bkd->bqk"}> : () -> ()
    %cst_55 = arith.constant dense<0.000000e+00> : vector<2x8x8xf32>
    %118 = tpu.matmul %113, %115, %cst_55 {dimension_numbers = #tpu.dot_dimension_numbers<[2], [2], [1], [1], [0, 0, 0, 1, 1, 1], [0], [0]>} : vector<2x8x32xbf16>, vector<2x8x32xbf16>, vector<2x8x8xf32> -> vector<2x8x8xf32>
    "tpu.trace_stop"() : () -> ()
    %cst_56 = arith.constant dense<0xFF800000> : vector<2x8xf32>
    %119 = vector.multi_reduction <maximumf>, %118, %cst_56 [2] : vector<2x8x8xf32> to vector<2x8xf32>
    %120 = vector.shape_cast %119 : vector<2x8xf32> to vector<2x8x1xf32>
    %121 = vector.broadcast %120 : vector<2x8x1xf32> to vector<2x8x8xf32>
    %122 = arith.subf %118, %121 : vector<2x8x8xf32>
    %123 = math.exp %122 : vector<2x8x8xf32>
    %cst_57 = arith.constant dense<0.000000e+00> : vector<2x8xf32>
    %124 = vector.multi_reduction <add>, %123, %cst_57 [2] : vector<2x8x8xf32> to vector<2x8xf32>
    %125 = vector.shape_cast %124 : vector<2x8xf32> to vector<2x8x1xf32>
    %126 = tpu.reciprocal %125 {approx = true} : vector<2x8x1xf32> -> vector<2x8x1xf32>
    %127 = vector.broadcast %126 : vector<2x8x1xf32> to vector<2x8x8xf32>
    %128 = arith.mulf %123, %127 : vector<2x8x8xf32>
    %129 = arith.truncf %128 : vector<2x8x8xf32> to vector<2x8x8xbf16>
    "tpu.trace_start"() <{level = 10 : i32, message = "bqk,bkd->bqd"}> : () -> ()
    %cst_58 = arith.constant dense<0.000000e+00> : vector<2x8x32xf32>
    %130 = tpu.matmul %129, %117, %cst_58 {dimension_numbers = #tpu.dot_dimension_numbers<[2], [1], [1], [2], [0, 0, 0, 1, 1, 2], [0], [0]>} : vector<2x8x8xbf16>, vector<2x8x32xbf16>, vector<2x8x32xf32> -> vector<2x8x32xf32>
    "tpu.trace_stop"() : () -> ()
    %131 = vector.shape_cast %130 : vector<2x8x32xf32> to vector<16x32xf32>
    %c0_59 = arith.constant 0 : index
    %c160_60 = arith.constant 160 : index
    %132 = vector.load %arg7[%c0_59, %c160_60] : memref<16x256xf32, #tpu.memory_space<vmem>>, vector<16x32xf32>
    tpu.vector_store %arg7[%c0_59, %c160_60], %131 {strides = array<i32>} : memref<16x256xf32, #tpu.memory_space<vmem>>, vector<16x32xf32>,
    %c0_61 = arith.constant 0 : index
    %c192 = arith.constant 192 : index
    %133 = vector.load %arg6[%c0_61, %c192] : memref<16x768xbf16, #tpu.memory_space<vmem>>, vector<16x32xbf16>
    %134 = vector.shape_cast %133 : vector<16x32xbf16> to vector<2x8x32xbf16>
    %c0_62 = arith.constant 0 : index
    %c448 = arith.constant 448 : index
    %135 = vector.load %arg6[%c0_62, %c448] : memref<16x768xbf16, #tpu.memory_space<vmem>>, vector<16x32xbf16>
    %136 = vector.shape_cast %135 : vector<16x32xbf16> to vector<2x8x32xbf16>
    %c0_63 = arith.constant 0 : index
    %c704 = arith.constant 704 : index
    %137 = vector.load %arg6[%c0_63, %c704] : memref<16x768xbf16, #tpu.memory_space<vmem>>, vector<16x32xbf16>
    %138 = vector.shape_cast %137 : vector<16x32xbf16> to vector<2x8x32xbf16>
    "tpu.trace_start"() <{level = 10 : i32, message = "bqd,bkd->bqk"}> : () -> ()
    %cst_64 = arith.constant dense<0.000000e+00> : vector<2x8x8xf32>
    %139 = tpu.matmul %134, %136, %cst_64 {dimension_numbers = #tpu.dot_dimension_numbers<[2], [2], [1], [1], [0, 0, 0, 1, 1, 1], [0], [0]>} : vector<2x8x32xbf16>, vector<2x8x32xbf16>, vector<2x8x8xf32> -> vector<2x8x8xf32>
    "tpu.trace_stop"() : () -> ()
    %cst_65 = arith.constant dense<0xFF800000> : vector<2x8xf32>
    %140 = vector.multi_reduction <maximumf>, %139, %cst_65 [2] : vector<2x8x8xf32> to vector<2x8xf32>
    %141 = vector.shape_cast %140 : vector<2x8xf32> to vector<2x8x1xf32>
    %142 = vector.broadcast %141 : vector<2x8x1xf32> to vector<2x8x8xf32>
    %143 = arith.subf %139, %142 : vector<2x8x8xf32>
    %144 = math.exp %143 : vector<2x8x8xf32>
    %cst_66 = arith.constant dense<0.000000e+00> : vector<2x8xf32>
    %145 = vector.multi_reduction <add>, %144, %cst_66 [2] : vector<2x8x8xf32> to vector<2x8xf32>
    %146 = vector.shape_cast %145 : vector<2x8xf32> to vector<2x8x1xf32>
    %147 = tpu.reciprocal %146 {approx = true} : vector<2x8x1xf32> -> vector<2x8x1xf32>
    %148 = vector.broadcast %147 : vector<2x8x1xf32> to vector<2x8x8xf32>
    %149 = arith.mulf %144, %148 : vector<2x8x8xf32>
    %150 = arith.truncf %149 : vector<2x8x8xf32> to vector<2x8x8xbf16>
    "tpu.trace_start"() <{level = 10 : i32, message = "bqk,bkd->bqd"}> : () -> ()
    %cst_67 = arith.constant dense<0.000000e+00> : vector<2x8x32xf32>
    %151 = tpu.matmul %150, %138, %cst_67 {dimension_numbers = #tpu.dot_dimension_numbers<[2], [1], [1], [2], [0, 0, 0, 1, 1, 2], [0], [0]>} : vector<2x8x8xbf16>, vector<2x8x32xbf16>, vector<2x8x32xf32> -> vector<2x8x32xf32>
    "tpu.trace_stop"() : () -> ()
    %152 = vector.shape_cast %151 : vector<2x8x32xf32> to vector<16x32xf32>
    %c0_68 = arith.constant 0 : index
    %c192_69 = arith.constant 192 : index
    %153 = vector.load %arg7[%c0_68, %c192_69] : memref<16x256xf32, #tpu.memory_space<vmem>>, vector<16x32xf32>
    tpu.vector_store %arg7[%c0_68, %c192_69], %152 {strides = array<i32>} : memref<16x256xf32, #tpu.memory_space<vmem>>, vector<16x32xf32>,
    %c0_70 = arith.constant 0 : index
    %c224 = arith.constant 224 : index
    %154 = vector.load %arg6[%c0_70, %c224] : memref<16x768xbf16, #tpu.memory_space<vmem>>, vector<16x32xbf16>
    %155 = vector.shape_cast %154 : vector<16x32xbf16> to vector<2x8x32xbf16>
    %c0_71 = arith.constant 0 : index
    %c480 = arith.constant 480 : index
    %156 = vector.load %arg6[%c0_71, %c480] : memref<16x768xbf16, #tpu.memory_space<vmem>>, vector<16x32xbf16>
    %157 = vector.shape_cast %156 : vector<16x32xbf16> to vector<2x8x32xbf16>
    %c0_72 = arith.constant 0 : index
    %c736 = arith.constant 736 : index
    %158 = vector.load %arg6[%c0_72, %c736] : memref<16x768xbf16, #tpu.memory_space<vmem>>, vector<16x32xbf16>
    %159 = vector.shape_cast %158 : vector<16x32xbf16> to vector<2x8x32xbf16>
    "tpu.trace_start"() <{level = 10 : i32, message = "bqd,bkd->bqk"}> : () -> ()
    %cst_73 = arith.constant dense<0.000000e+00> : vector<2x8x8xf32>
    %160 = tpu.matmul %155, %157, %cst_73 {dimension_numbers = #tpu.dot_dimension_numbers<[2], [2], [1], [1], [0, 0, 0, 1, 1, 1], [0], [0]>} : vector<2x8x32xbf16>, vector<2x8x32xbf16>, vector<2x8x8xf32> -> vector<2x8x8xf32>
    "tpu.trace_stop"() : () -> ()
    %cst_74 = arith.constant dense<0xFF800000> : vector<2x8xf32>
    %161 = vector.multi_reduction <maximumf>, %160, %cst_74 [2] : vector<2x8x8xf32> to vector<2x8xf32>
    %162 = vector.shape_cast %161 : vector<2x8xf32> to vector<2x8x1xf32>
    %163 = vector.broadcast %162 : vector<2x8x1xf32> to vector<2x8x8xf32>
    %164 = arith.subf %160, %163 : vector<2x8x8xf32>
    %165 = math.exp %164 : vector<2x8x8xf32>
    %cst_75 = arith.constant dense<0.000000e+00> : vector<2x8xf32>
    %166 = vector.multi_reduction <add>, %165, %cst_75 [2] : vector<2x8x8xf32> to vector<2x8xf32>
    %167 = vector.shape_cast %166 : vector<2x8xf32> to vector<2x8x1xf32>
    %168 = tpu.reciprocal %167 {approx = true} : vector<2x8x1xf32> -> vector<2x8x1xf32>
    %169 = vector.broadcast %168 : vector<2x8x1xf32> to vector<2x8x8xf32>
    %170 = arith.mulf %165, %169 : vector<2x8x8xf32>
    %171 = arith.truncf %170 : vector<2x8x8xf32> to vector<2x8x8xbf16>
    "tpu.trace_start"() <{level = 10 : i32, message = "bqk,bkd->bqd"}> : () -> ()
    %cst_76 = arith.constant dense<0.000000e+00> : vector<2x8x32xf32>
    %172 = tpu.matmul %171, %159, %cst_76 {dimension_numbers = #tpu.dot_dimension_numbers<[2], [1], [1], [2], [0, 0, 0, 1, 1, 2], [0], [0]>} : vector<2x8x8xbf16>, vector<2x8x32xbf16>, vector<2x8x32xf32> -> vector<2x8x32xf32>
    "tpu.trace_stop"() : () -> ()
    %173 = vector.shape_cast %172 : vector<2x8x32xf32> to vector<16x32xf32>
    %c0_77 = arith.constant 0 : index
    %c224_78 = arith.constant 224 : index
    %174 = vector.load %arg7[%c0_77, %c224_78] : memref<16x256xf32, #tpu.memory_space<vmem>>, vector<16x32xf32>
    tpu.vector_store %arg7[%c0_77, %c224_78], %173 {strides = array<i32>} : memref<16x256xf32, #tpu.memory_space<vmem>>, vector<16x32xf32>,
    %c0_79 = arith.constant 0 : index
    %c0_80 = arith.constant 0 : index
    %175 = vector.load %arg7[%c0_79, %c0_80] : memref<16x256xf32, #tpu.memory_space<vmem>>, vector<16x256xf32>
    %176 = arith.truncf %175 : vector<16x256xf32> to vector<16x256xbf16>
    %c0_81 = arith.constant 0 : index
    %c0_82 = arith.constant 0 : index
    %177 = vector.load %arg3[%c0_81, %c0_82] : memref<256x32xbf16, #tpu.memory_space<vmem>>, vector<256x32xbf16>
    %cst_83 = arith.constant dense<0.000000e+00> : vector<16x32xf32>
    %178 = tpu.matmul %176, %177, %cst_83 {dimension_numbers = #tpu.dot_dimension_numbers<[1], [0], [0], [1], [0, 0, 1, 1], [], []>} : vector<16x256xbf16>, vector<256x32xbf16>, vector<16x32xf32> -> vector<16x32xf32>
    %c0_84 = arith.constant 0 : index
    %c0_85 = arith.constant 0 : index
    %179 = vector.load %arg4[%c0_84, %c0_85] : memref<1x32xf32, #tpu.memory_space<vmem>>, vector<1x32xf32>
    %180 = vector.broadcast %179 : vector<1x32xf32> to vector<16x32xf32>
    %181 = arith.addf %178, %180 : vector<16x32xf32>
    %182 = vector.shape_cast %181 : vector<16x32xf32> to vector<2x8x32xf32>
    %c0_86 = arith.constant 0 : index
    %c0_87 = arith.constant 0 : index
    %c0_88 = arith.constant 0 : index
    %183 = vector.load %arg5[%c0_86, %c0_87, %c0_88] : memref<2x8x32xf32, #tpu.memory_space<vmem>>, vector<2x8x32xf32>
    tpu.vector_store %arg5[%c0_86, %c0_87, %c0_88], %182 {strides = array<i32>} : memref<2x8x32xf32, #tpu.memory_space<vmem>>, vector<2x8x32xf32>,
    return
  }
  func.func @transform_0(%arg0: i32) -> (i32, i32, i32) {
    %c0_i32 = arith.constant 0 : i32
    %c0_i32_0 = arith.constant 0 : i32
    %c0_i32_1 = arith.constant 0 : i32
    return %arg0, %c0_i32, %c0_i32_0 : i32, i32, i32
  }
  func.func @transform_1(%arg0: i32) -> (i32, i32) {
    %c0_i32 = arith.constant 0 : i32
    %c0_i32_0 = arith.constant 0 : i32
    %c0_i32_1 = arith.constant 0 : i32
    return %c0_i32, %c0_i32_0 : i32, i32
  }
  func.func @transform_2(%arg0: i32) -> (i32, i32) {
    %c0_i32 = arith.constant 0 : i32
    %c0_i32_0 = arith.constant 0 : i32
    %c0_i32_1 = arith.constant 0 : i32
    return %c0_i32, %c0_i32_0 : i32, i32
  }
  func.func @transform_3(%arg0: i32) -> (i32, i32) {
    %c0_i32 = arith.constant 0 : i32
    %c0_i32_0 = arith.constant 0 : i32
    %c0_i32_1 = arith.constant 0 : i32
    return %c0_i32, %c0_i32_0 : i32, i32
  }
  func.func @transform_4(%arg0: i32) -> (i32, i32, i32) {
    %c0_i32 = arith.constant 0 : i32
    %c0_i32_0 = arith.constant 0 : i32
    %c0_i32_1 = arith.constant 0 : i32
    return %arg0, %c0_i32, %c0_i32_0 : i32, i32, i32
  }
}

</mosaic_0001>

<llo_original>
// kernel: tpu_custom_call.1
$region0: #{tpu_custom_call.1}
  #allocation0 [shape = 'u32[]', space=smem, size = 0x4, offset = 0x4, fixed_abs, tag = 'smem constant byte address 0x4 - core index']
  #allocation1 [shape = 'u32[144,128]{1,0:T(1,128)}', space=vmem, size = 0x12000, scoped, tag = 'internal scratch']
  #allocation2 [shape = 'bf16[16,768]{1,0:T(16,128)(2,1)}', space=vmem, size = 0x6000, scoped, tag = 'scratch operand']
  #allocation3 [shape = 'f32[16,256]{1,0:T(8,128)}', space=vmem, size = 0x4000, scoped, tag = 'scratch operand']
  %s0 = inlined_call_operand.vmem [shape: f32[2,8,32], index: 0, kind: input, shape index: {}]
  %s1 = inlined_call_operand.vmem [shape: bf16[32,768], index: 1, kind: input, shape index: {}]
  %s2 = inlined_call_operand.vmem [shape: bf16[256,32], index: 2, kind: input, shape index: {}]
  %s3 = inlined_call_operand.vmem [shape: f32[1,32], index: 3, kind: input, shape index: {}]
  %s4 = inlined_call_operand.hbm [shape: f32[2,8,32], index: 4, kind: output, shape index: {}]
  %s5 = sld [smem:[#allocation0]]
  $region26: #{tpu_custom_call.1} parent=0
    _
  %s7 = ssub.s32 1, %s5
  %s8 = scalar_select 0, %s7, %s5
  $region1: #{tpu_custom_call.1} parent=0
    #allocation4 [shape = 'u8[8192]{0}', space=vmem, size = 0x2000, scoped, tag = 'output window, operand 0, single buffered']
    #allocation5 [shape = 's32[1]{0}', space=sflag, size = 0x4, scoped, tag = 'scoped memory for tpu_custom_call.1']
    %9 = vsyncpa [#allocation5], 0
    // Predicated region
    $region2: #{tpu_custom_call.1} parent=1 // pred_check
      _
    $region3: #{tpu_custom_call.1} parent=1 // pred_check_branch
      %11 = sbr.rel (0) target = $region5
    $region4: #{tpu_custom_call.1} parent=1 // pred_region
      _
    $region5: #{tpu_custom_call.1} parent=1 // pred_fallthru
      _
    // Predicated region
    $region6: #{tpu_custom_call.1} parent=1 // pred_check
      _
    $region7: #{tpu_custom_call.1} parent=1 // pred_check_branch
      %13 = sbr.rel (0) target = $region9
    $region8: #{tpu_custom_call.1} parent=1 // pred_region
      _
    $region9: #{tpu_custom_call.1} parent=1 // pred_fallthru
      _
    // Predicated region
    $region10: #{tpu_custom_call.1} parent=1 // pred_check
      _
    $region11: #{tpu_custom_call.1} parent=1 // pred_check_branch
      %15 = sbr.rel (0) target = $region13
    $region12: #{tpu_custom_call.1} parent=1 // pred_region
      _
    $region13: #{tpu_custom_call.1} parent=1 // pred_fallthru
      _
    // Predicated region
    $region14: #{tpu_custom_call.1} parent=1 // pred_check
      _
    $region15: #{tpu_custom_call.1} parent=1 // pred_check_branch
      %17 = sbr.rel (0) target = $region17
    $region16: #{tpu_custom_call.1} parent=1 // pred_region
      _
    $region17: #{tpu_custom_call.1} parent=1 // pred_fallthru
      _
    %v19 = vld [vmem:[%s0] sm:$0xff]
    %v20 = vld [vmem:[%s0 + $0x8] sm:$0xff]
    %v21 = vpack.c.bf16 %v20, %v19
    %v22 = vld [vmem:[%s1] sm:$0xff]
    %v23 = vld [vmem:[%s1 + $0x8] sm:$0xff]
    %v24 = vld [vmem:[%s1 + $0x10] sm:$0xff]
    %v25 = vld [vmem:[%s1 + $0x18] sm:$0xff]
    %v26 = vld [vmem:[%s1 + $0x20] sm:$0xff]
    %v27 = vld [vmem:[%s1 + $0x28] sm:$0xff]
    %v28 = vld [vmem:[%s1 + $0x30] sm:$0xff]
    %v29 = vld [vmem:[%s1 + $0x38] sm:$0xff]
    %v30 = vld [vmem:[%s1 + $0x40] sm:$0xff]
    %v31 = vld [vmem:[%s1 + $0x48] sm:$0xff]
    %v32 = vld [vmem:[%s1 + $0x50] sm:$0xff]
    %v33 = vld [vmem:[%s1 + $0x58] sm:$0xff]
    %v46 = vunpack.c.l.b16 %v22
    %v47 = vunpack.c.h.b16 %v22
    %v48 = vunpack.c.l.b16 %v23
    %v49 = vunpack.c.h.b16 %v23
    %v50 = vunpack.c.l.b16 %v24
    %v51 = vunpack.c.h.b16 %v24
    %v52 = vunpack.c.l.b16 %v25
    %v53 = vunpack.c.h.b16 %v25
    %v54 = vunpack.c.l.b16 %v26
    %v55 = vunpack.c.h.b16 %v26
    %v56 = vunpack.c.l.b16 %v27
    %v57 = vunpack.c.h.b16 %v27
    %v58 = vunpack.c.l.b16 %v28
    %v59 = vunpack.c.h.b16 %v28
    %v60 = vunpack.c.l.b16 %v29
    %v61 = vunpack.c.h.b16 %v29
    %v62 = vunpack.c.l.b16 %v30
    %v63 = vunpack.c.h.b16 %v30
    %v64 = vunpack.c.l.b16 %v31
    %v65 = vunpack.c.h.b16 %v31
    %v66 = vunpack.c.l.b16 %v32
    %v67 = vunpack.c.h.b16 %v32
    %v68 = vunpack.c.l.b16 %v33
    %v69 = vunpack.c.h.b16 %v33
    %v70 = vpack.c.b16 %v52, %v46
    %v71 = vpack.c.b16 %v53, %v47
    %v72 = vpack.c.b16 %v54, %v48
    %v73 = vpack.c.b16 %v55, %v49
    %v74 = vpack.c.b16 %v56, %v50
    %v75 = vpack.c.b16 %v57, %v51
    %v76 = vpack.c.b16 %v64, %v58
    %v77 = vpack.c.b16 %v65, %v59
    %v78 = vpack.c.b16 %v66, %v60
    %v79 = vpack.c.b16 %v67, %v61
    %v80 = vpack.c.b16 %v68, %v62
    %v81 = vpack.c.b16 %v69, %v63
    %vm94 = vcmask 261120
    %v96 = vsel %vm94, %v21, 0
    %98 = vmatprep.subr.bf16.mxu0 %v71
    %99 = vmatpush1.bf16.msra.mxu0 %v70
    %100 = vmatprep.subr.bf16.mxu0 %v77
    %101 = vmatpush1.bf16.msra.mxu0 %v76
    %102 = vmatprep.subr.bf16.mxu0 0
    %103 = vmatpush1.bf16.msra.mxu0 0
    %104 = vmatprep.subr.bf16.mxu0 0
    %105 = vmatpush1.bf16.msra.mxu0 0
    %106 = vmatprep.subr.bf16.mxu0 0
    %107 = vmatpush1.bf16.msra.mxu0 0
    %108 = vmatprep.subr.bf16.mxu0 0
    %109 = vmatpush1.bf16.msra.mxu0 0
    %110 = vmatprep.subr.bf16.mxu0 0
    %111 = vmatpush1.bf16.msra.mxu0 0
    %112 = vmatprep.subr.bf16.mxu0 0
    %113 = vmatpush1.bf16.msra.mxu0 0
    %114 = vmatprep.subr.bf16.mxu0 0
    %115 = vmatpush1.bf16.msra.mxu0 0
    %116 = vmatprep.subr.bf16.mxu0 0
    %117 = vmatpush1.bf16.msra.mxu0 0
    %118 = vmatprep.subr.bf16.mxu0 0
    %119 = vmatpush1.bf16.msra.mxu0 0
    %120 = vmatprep.subr.bf16.mxu0 0
    %121 = vmatpush1.bf16.msra.mxu0 0
    %122 = vmatprep.subr.bf16.mxu0 0
    %123 = vmatpush1.bf16.msra.mxu0 0
    %124 = vmatprep.subr.bf16.mxu0 0
    %125 = vmatpush1.bf16.msra.mxu0 0
    %126 = vmatprep.subr.bf16.mxu0 0
    %127 = vmatpush1.bf16.msra.mxu0 0
    %128 = vmatprep.subr.bf16.mxu0 0
    %129 = vmatpush1.bf16.msra.mxu0 0
    %130 = vmatprep.mubr.bf16.mxu0 0
    %131 = vmatmul.mubr.bf16.gmra.mrb[0].mxu0 %v96
    %v132 = vpop.f32.mrb[0].mxu0
    %v133 = vadd.f32 0.0, %v132
    %v134 = vpop.f32.mrb[0].mxu0
    %v135 = vadd.f32 0.0, %v134
    %v136 = vpop.f32.mrb[0].mxu0
    %v137 = vadd.f32 0.0, %v136
    %v138 = vpop.f32.mrb[0].mxu0
    %v139 = vadd.f32 0.0, %v138
    %140 = vdwg.mxu0
    %141 = vmatprep.subr.bf16.mxu0 %v73
    %142 = vmatpush1.bf16.msra.mxu0 %v72
    %143 = vmatprep.subr.bf16.mxu0 %v79
    %144 = vmatpush1.bf16.msra.mxu0 %v78
    %145 = vmatprep.subr.bf16.mxu0 0
    %146 = vmatpush1.bf16.msra.mxu0 0
    %147 = vmatprep.subr.bf16.mxu0 0
    %148 = vmatpush1.bf16.msra.mxu0 0
    %149 = vmatprep.subr.bf16.mxu0 0
    %150 = vmatpush1.bf16.msra.mxu0 0
    %151 = vmatprep.subr.bf16.mxu0 0
    %152 = vmatpush1.bf16.msra.mxu0 0
    %153 = vmatprep.subr.bf16.mxu0 0
    %154 = vmatpush1.bf16.msra.mxu0 0
    %155 = vmatprep.subr.bf16.mxu0 0
    %156 = vmatpush1.bf16.msra.mxu0 0
    %157 = vmatprep.subr.bf16.mxu0 0
    %158 = vmatpush1.bf16.msra.mxu0 0
    %159 = vmatprep.subr.bf16.mxu0 0
    %160 = vmatpush1.bf16.msra.mxu0 0
    %161 = vmatprep.subr.bf16.mxu0 0
    %162 = vmatpush1.bf16.msra.mxu0 0
    %163 = vmatprep.subr.bf16.mxu0 0
    %164 = vmatpush1.bf16.msra.mxu0 0
    %165 = vmatprep.subr.bf16.mxu0 0
    %166 = vmatpush1.bf16.msra.mxu0 0
    %167 = vmatprep.subr.bf16.mxu0 0
    %168 = vmatpush1.bf16.msra.mxu0 0
    %169 = vmatprep.subr.bf16.mxu0 0
    %170 = vmatpush1.bf16.msra.mxu0 0
    %171 = vmatprep.subr.bf16.mxu0 0
    %172 = vmatpush1.bf16.msra.mxu0 0
    %173 = vmatprep.mubr.bf16.mxu0 0
    %174 = vmatmul.mubr.bf16.gmra.mrb[0].mxu0 %v96
    %v175 = vpop.f32.mrb[0].mxu0
    %v176 = vadd.f32 0.0, %v175
    %v177 = vpop.f32.mrb[0].mxu0
    %v178 = vadd.f32 0.0, %v177
    %v179 = vpop.f32.mrb[0].mxu0
    %v180 = vadd.f32 0.0, %v179
    %v181 = vpop.f32.mrb[0].mxu0
    %v182 = vadd.f32 0.0, %v181
    %183 = vdwg.mxu0
    %184 = vmatprep.subr.bf16.mxu0 %v75
    %185 = vmatpush1.bf16.msra.mxu0 %v74
    %186 = vmatprep.subr.bf16.mxu0 %v81
    %187 = vmatpush1.bf16.msra.mxu0 %v80
    %188 = vmatprep.subr.bf16.mxu0 0
    %189 = vmatpush1.bf16.msra.mxu0 0
    %190 = vmatprep.subr.bf16.mxu0 0
    %191 = vmatpush1.bf16.msra.mxu0 0
    %192 = vmatprep.subr.bf16.mxu0 0
    %193 = vmatpush1.bf16.msra.mxu0 0
    %194 = vmatprep.subr.bf16.mxu0 0
    %195 = vmatpush1.bf16.msra.mxu0 0
    %196 = vmatprep.subr.bf16.mxu0 0
    %197 = vmatpush1.bf16.msra.mxu0 0
    %198 = vmatprep.subr.bf16.mxu0 0
    %199 = vmatpush1.bf16.msra.mxu0 0
    %200 = vmatprep.subr.bf16.mxu0 0
    %201 = vmatpush1.bf16.msra.mxu0 0
    %202 = vmatprep.subr.bf16.mxu0 0
    %203 = vmatpush1.bf16.msra.mxu0 0
    %204 = vmatprep.subr.bf16.mxu0 0
    %205 = vmatpush1.bf16.msra.mxu0 0
    %206 = vmatprep.subr.bf16.mxu0 0
    %207 = vmatpush1.bf16.msra.mxu0 0
    %208 = vmatprep.subr.bf16.mxu0 0
    %209 = vmatpush1.bf16.msra.mxu0 0
    %210 = vmatprep.subr.bf16.mxu0 0
    %211 = vmatpush1.bf16.msra.mxu0 0
    %212 = vmatprep.subr.bf16.mxu0 0
    %213 = vmatpush1.bf16.msra.mxu0 0
    %214 = vmatprep.subr.bf16.mxu0 0
    %215 = vmatpush1.bf16.msra.mxu0 0
    %216 = vmatprep.mubr.bf16.mxu0 0
    %217 = vmatmul.mubr.bf16.gmra.mrb[0].mxu0 %v96
    %v218 = vpop.f32.mrb[0].mxu0
    %v219 = vadd.f32 0.0, %v218
    %v220 = vpop.f32.mrb[0].mxu0
    %v221 = vadd.f32 0.0, %v220
    %v222 = vpop.f32.mrb[0].mxu0
    %v223 = vadd.f32 0.0, %v222
    %v224 = vpop.f32.mrb[0].mxu0
    %v225 = vadd.f32 0.0, %v224
    %226 = vdwg.mxu0
    %v227 = vpack.c.bf16 %v137, %v133
    %v228 = vpack.c.bf16 %v139, %v135
    %v229 = vpack.c.bf16 %v180, %v176
    %v230 = vpack.c.bf16 %v182, %v178
    %v231 = vpack.c.bf16 %v223, %v219
    %v232 = vpack.c.bf16 %v225, %v221
    %233 = vst [vmem:[#allocation2] sm:$0xff] %v227
    %234 = vst [vmem:[#allocation2 + $0x8] sm:$0xff] %v228
    %235 = vst [vmem:[#allocation2 + $0x10] sm:$0xff] %v229
    %236 = vst [vmem:[#allocation2 + $0x18] sm:$0xff] %v230
    %237 = vst [vmem:[#allocation2 + $0x20] sm:$0xff] %v231
    %238 = vst [vmem:[#allocation2 + $0x28] sm:$0xff] %v232
    %v239 = vld [vmem:[#allocation2] sm:$0xff]
    %v241 = vunpack.c.l.b16 %v239
    %v242 = vunpack.c.h.b16 %v239
    %v243 = vpack.c.b16 %v241, %v241
    %v244 = vpack.c.b16 %v242, %v242
    %v245 = vld [vmem:[#allocation2 + $0x10] sm:$0xff]
    %v247 = vunpack.c.l.b16 %v245
    %v248 = vunpack.c.h.b16 %v245
    %v249 = vpack.c.b16 %v247, %v247
    %v250 = vpack.c.b16 %v248, %v248
    %v251 = vld [vmem:[#allocation2 + $0x20] sm:$0xff]
    %v253 = vunpack.c.l.b16 %v251
    %v254 = vunpack.c.h.b16 %v251
    %v255 = vpack.c.b16 %v253, %v253
    %v256 = vpack.c.b16 %v254, %v254
    %v258 = vsel %vm94, %v243, 0
    %v261 = vsel %vm94, %v249, 0
    %263 = vmatprep.subr.bf16.mxu0 0
    %264 = vmatpush1.bf16.xpose.msra.mxu0 %v261
    %265 = vmatprep.subr.bf16.mxu0 0
    %266 = vmatpush1.bf16.xpose.msra.mxu0 0
    %267 = vmatprep.subr.bf16.mxu0 0
    %268 = vmatpush1.bf16.xpose.msra.mxu0 0
    %269 = vmatprep.subr.bf16.mxu0 0
    %270 = vmatpush1.bf16.xpose.msra.mxu0 0
    %271 = vmatprep.subr.bf16.mxu0 0
    %272 = vmatpush1.bf16.xpose.msra.mxu0 0
    %273 = vmatprep.subr.bf16.mxu0 0
    %274 = vmatpush1.bf16.xpose.msra.mxu0 0
    %275 = vmatprep.subr.bf16.mxu0 0
    %276 = vmatpush1.bf16.xpose.msra.mxu0 0
    %277 = vmatprep.subr.bf16.mxu0 0
    %278 = vmatpush1.bf16.xpose.msra.mxu0 0
    %279 = vmatprep.subr.bf16.mxu0 0
    %280 = vmatpush1.bf16.xpose.msra.mxu0 0
    %281 = vmatprep.subr.bf16.mxu0 0
    %282 = vmatpush1.bf16.xpose.msra.mxu0 0
    %283 = vmatprep.subr.bf16.mxu0 0
    %284 = vmatpush1.bf16.xpose.msra.mxu0 0
    %285 = vmatprep.subr.bf16.mxu0 0
    %286 = vmatpush1.bf16.xpose.msra.mxu0 0
    %287 = vmatprep.subr.bf16.mxu0 0
    %288 = vmatpush1.bf16.xpose.msra.mxu0 0
    %289 = vmatprep.subr.bf16.mxu0 0
    %290 = vmatpush1.bf16.xpose.msra.mxu0 0
    %291 = vmatprep.subr.bf16.mxu0 0
    %292 = vmatpush1.bf16.xpose.msra.mxu0 0
    %293 = vmatprep.subr.bf16.mxu0 0
    %294 = vmatpush1.bf16.xpose.msra.mxu0 0
    %295 = vmatprep.mubr.bf16.mxu0 0
    %296 = vmatmul.mubr.bf16.gmra.mrb[0].mxu0 %v258
    %v297 = vpop.f32.mrb[0].mxu0
    %v298 = vadd.f32 0.0, %v297
    %v299 = vpop.f32.mrb[0].mxu0
    %v300 = vpop.f32.mrb[0].mxu0
    %v301 = vpop.f32.mrb[0].mxu0
    %302 = vdwg.mxu0
    %v304 = vsel %vm94, %v244, 0
    %v307 = vsel %vm94, %v250, 0
    %309 = vmatprep.subr.bf16.mxu0 0
    %310 = vmatpush1.bf16.xpose.msra.mxu0 %v307
    %311 = vmatprep.subr.bf16.mxu0 0
    %312 = vmatpush1.bf16.xpose.msra.mxu0 0
    %313 = vmatprep.subr.bf16.mxu0 0
    %314 = vmatpush1.bf16.xpose.msra.mxu0 0
    %315 = vmatprep.subr.bf16.mxu0 0
    %316 = vmatpush1.bf16.xpose.msra.mxu0 0
    %317 = vmatprep.subr.bf16.mxu0 0
    %318 = vmatpush1.bf16.xpose.msra.mxu0 0
    %319 = vmatprep.subr.bf16.mxu0 0
    %320 = vmatpush1.bf16.xpose.msra.mxu0 0
    %321 = vmatprep.subr.bf16.mxu0 0
    %322 = vmatpush1.bf16.xpose.msra.mxu0 0
    %323 = vmatprep.subr.bf16.mxu0 0
    %324 = vmatpush1.bf16.xpose.msra.mxu0 0
    %325 = vmatprep.subr.bf16.mxu0 0
    %326 = vmatpush1.bf16.xpose.msra.mxu0 0
    %327 = vmatprep.subr.bf16.mxu0 0
    %328 = vmatpush1.bf16.xpose.msra.mxu0 0
    %329 = vmatprep.subr.bf16.mxu0 0
    %330 = vmatpush1.bf16.xpose.msra.mxu0 0
    %331 = vmatprep.subr.bf16.mxu0 0
    %332 = vmatpush1.bf16.xpose.msra.mxu0 0
    %333 = vmatprep.subr.bf16.mxu0 0
    %334 = vmatpush1.bf16.xpose.msra.mxu0 0
    %335 = vmatprep.subr.bf16.mxu0 0
    %336 = vmatpush1.bf16.xpose.msra.mxu0 0
    %337 = vmatprep.subr.bf16.mxu0 0
    %338 = vmatpush1.bf16.xpose.msra.mxu0 0
    %339 = vmatprep.subr.bf16.mxu0 0
    %340 = vmatpush1.bf16.xpose.msra.mxu0 0
    %341 = vmatprep.mubr.bf16.mxu0 0
    %342 = vmatmul.mubr.bf16.gmra.mrb[0].mxu0 %v304
    %v343 = vpop.f32.mrb[0].mxu0
    %v344 = vadd.f32 0.0, %v343
    %v345 = vpop.f32.mrb[0].mxu0
    %v346 = vpop.f32.mrb[0].mxu0
    %v347 = vpop.f32.mrb[0].mxu0
    %348 = vdwg.mxu0
    %vm349 = vcmask 64512
    %v350 = vsel %vm349, %v298, -inf
    %351 = vmax.xlane.f32.xlu0 %v350
    %v352 = vpop.xlane.xlu0 %351
    %v353 = vsel %vm349, %v344, -inf
    %354 = vmax.xlane.f32.xlu0 %v353
    %v355 = vpop.xlane.xlu0 %354
    %v356 = vsub.f32 %v298, %v352
    %v357 = vsub.f32 %v344, %v355
    %v358 = vmul.f32 %v356, 1.442695
    %v359 = vpow.pop %v358
    %v360 = vmul.f32 %v357, 1.442695
    %v361 = vpow.pop %v360
    %v362 = vsel %vm349, %v359, 0.0
    %363 = vadd.xlane.f32.xlu0 %v362
    %v364 = vpop.xlane.xlu0 %363
    %v365 = vsel %vm349, %v361, 0.0
    %366 = vadd.xlane.f32.xlu0 %v365
    %v367 = vpop.xlane.xlu0 %366
    %v368 = vrcp.pop %v364
    %v369 = vrcp.pop %v367
    %v370 = vmul.f32 %v359, %v368
    %v371 = vmul.f32 %v361, %v369
    %v372 = vpack.c.bf16 %v370, %v370
    %v373 = vpack.c.bf16 %v371, %v371
    %v375 = vsel %vm349, %v372, 0
    %vm377 = vcmask 1043456
    %v379 = vsel %vm377, %v255, 0
    %381 = vmatprep.subr.bf16.mxu0 0
    %382 = vmatpush1.bf16.msra.mxu0 %v379
    %383 = vmatprep.subr.bf16.mxu0 0
    %384 = vmatpush1.bf16.msra.mxu0 0
    %385 = vmatprep.subr.bf16.mxu0 0
    %386 = vmatpush1.bf16.msra.mxu0 0
    %387 = vmatprep.subr.bf16.mxu0 0
    %388 = vmatpush1.bf16.msra.mxu0 0
    %389 = vmatprep.subr.bf16.mxu0 0
    %390 = vmatpush1.bf16.msra.mxu0 0
    %391 = vmatprep.subr.bf16.mxu0 0
    %392 = vmatpush1.bf16.msra.mxu0 0
    %393 = vmatprep.subr.bf16.mxu0 0
    %394 = vmatpush1.bf16.msra.mxu0 0
    %395 = vmatprep.subr.bf16.mxu0 0
    %396 = vmatpush1.bf16.msra.mxu0 0
    %397 = vmatprep.subr.bf16.mxu0 0
    %398 = vmatpush1.bf16.msra.mxu0 0
    %399 = vmatprep.subr.bf16.mxu0 0
    %400 = vmatpush1.bf16.msra.mxu0 0
    %401 = vmatprep.subr.bf16.mxu0 0
    %402 = vmatpush1.bf16.msra.mxu0 0
    %403 = vmatprep.subr.bf16.mxu0 0
    %404 = vmatpush1.bf16.msra.mxu0 0
    %405 = vmatprep.subr.bf16.mxu0 0
    %406 = vmatpush1.bf16.msra.mxu0 0
    %407 = vmatprep.subr.bf16.mxu0 0
    %408 = vmatpush1.bf16.msra.mxu0 0
    %409 = vmatprep.subr.bf16.mxu0 0
    %410 = vmatpush1.bf16.msra.mxu0 0
    %411 = vmatprep.subr.bf16.mxu0 0
    %412 = vmatpush1.bf16.msra.mxu0 0
    %413 = vmatprep.mubr.bf16.mxu0 0
    %414 = vmatmul.mubr.bf16.gmra.mrb[0].mxu0 %v375
    %v415 = vpop.f32.mrb[0].mxu0
    %v416 = vadd.f32 0.0, %v415
    %v417 = vpop.f32.mrb[0].mxu0
    %v418 = vpop.f32.mrb[0].mxu0
    %v419 = vpop.f32.mrb[0].mxu0
    %420 = vdwg.mxu0
    %v422 = vsel %vm349, %v373, 0
    %v425 = vsel %vm377, %v256, 0
    %427 = vmatprep.subr.bf16.mxu0 0
    %428 = vmatpush1.bf16.msra.mxu0 %v425
    %429 = vmatprep.subr.bf16.mxu0 0
    %430 = vmatpush1.bf16.msra.mxu0 0
    %431 = vmatprep.subr.bf16.mxu0 0
    %432 = vmatpush1.bf16.msra.mxu0 0
    %433 = vmatprep.subr.bf16.mxu0 0
    %434 = vmatpush1.bf16.msra.mxu0 0
    %435 = vmatprep.subr.bf16.mxu0 0
    %436 = vmatpush1.bf16.msra.mxu0 0
    %437 = vmatprep.subr.bf16.mxu0 0
    %438 = vmatpush1.bf16.msra.mxu0 0
    %439 = vmatprep.subr.bf16.mxu0 0
    %440 = vmatpush1.bf16.msra.mxu0 0
    %441 = vmatprep.subr.bf16.mxu0 0
    %442 = vmatpush1.bf16.msra.mxu0 0
    %443 = vmatprep.subr.bf16.mxu0 0
    %444 = vmatpush1.bf16.msra.mxu0 0
    %445 = vmatprep.subr.bf16.mxu0 0
    %446 = vmatpush1.bf16.msra.mxu0 0
    %447 = vmatprep.subr.bf16.mxu0 0
    %448 = vmatpush1.bf16.msra.mxu0 0
    %449 = vmatprep.subr.bf16.mxu0 0
    %450 = vmatpush1.bf16.msra.mxu0 0
    %451 = vmatprep.subr.bf16.mxu0 0
    %452 = vmatpush1.bf16.msra.mxu0 0
    %453 = vmatprep.subr.bf16.mxu0 0
    %454 = vmatpush1.bf16.msra.mxu0 0
    %455 = vmatprep.subr.bf16.mxu0 0
    %456 = vmatpush1.bf16.msra.mxu0 0
    %457 = vmatprep.subr.bf16.mxu0 0
    %458 = vmatpush1.bf16.msra.mxu0 0
    %459 = vmatprep.mubr.bf16.mxu0 0
    %460 = vmatmul.mubr.bf16.gmra.mrb[0].mxu0 %v422
    %v461 = vpop.f32.mrb[0].mxu0
    %v462 = vadd.f32 0.0, %v461
    %v463 = vpop.f32.mrb[0].mxu0
    %v464 = vpop.f32.mrb[0].mxu0
    %v465 = vpop.f32.mrb[0].mxu0
    %466 = vdwg.mxu0
    %467 = vst.msk [vmem:[#allocation3] sm:$0xff] %vm94, %v416
    %468 = vst.msk [vmem:[#allocation3 + $0x10] sm:$0xff] %vm94, %v462
    %v469 = vld [vmem:[#allocation2] sm:$0xff]
    %v471 = vunpack.c.l.b16 %v469
    %v472 = vunpack.c.h.b16 %v469
    %v473 = vld [vmem:[#allocation2 + $0x10] sm:$0xff]
    %v475 = vunpack.c.l.b16 %v473
    %v476 = vunpack.c.h.b16 %v473
    %v477 = vld [vmem:[#allocation2 + $0x20] sm:$0xff]
    %v479 = vunpack.c.l.b16 %v477
    %v480 = vunpack.c.h.b16 %v477
    %v481 = vpack.c.b16 %v471, %v471
    %482 = vrot.lane.b32.xlu0 %v481, 96
    %v483 = vpop.permute.xlu0 %482
    %v484 = vpack.c.b16 %v475, %v475
    %485 = vrot.lane.b32.xlu0 %v484, 96
    %v486 = vpop.permute.xlu0 %485
    %v488 = vsel %vm94, %v483, 0
    %v491 = vsel %vm94, %v486, 0
    %493 = vmatprep.subr.bf16.mxu0 0
    %494 = vmatpush1.bf16.xpose.msra.mxu0 %v491
    %495 = vmatprep.subr.bf16.mxu0 0
    %496 = vmatpush1.bf16.xpose.msra.mxu0 0
    %497 = vmatprep.subr.bf16.mxu0 0
    %498 = vmatpush1.bf16.xpose.msra.mxu0 0
    %499 = vmatprep.subr.bf16.mxu0 0
    %500 = vmatpush1.bf16.xpose.msra.mxu0 0
    %501 = vmatprep.subr.bf16.mxu0 0
    %502 = vmatpush1.bf16.xpose.msra.mxu0 0
    %503 = vmatprep.subr.bf16.mxu0 0
    %504 = vmatpush1.bf16.xpose.msra.mxu0 0
    %505 = vmatprep.subr.bf16.mxu0 0
    %506 = vmatpush1.bf16.xpose.msra.mxu0 0
    %507 = vmatprep.subr.bf16.mxu0 0
    %508 = vmatpush1.bf16.xpose.msra.mxu0 0
    %509 = vmatprep.subr.bf16.mxu0 0
    %510 = vmatpush1.bf16.xpose.msra.mxu0 0
    %511 = vmatprep.subr.bf16.mxu0 0
    %512 = vmatpush1.bf16.xpose.msra.mxu0 0
    %513 = vmatprep.subr.bf16.mxu0 0
    %514 = vmatpush1.bf16.xpose.msra.mxu0 0
    %515 = vmatprep.subr.bf16.mxu0 0
    %516 = vmatpush1.bf16.xpose.msra.mxu0 0
    %517 = vmatprep.subr.bf16.mxu0 0
    %518 = vmatpush1.bf16.xpose.msra.mxu0 0
    %519 = vmatprep.subr.bf16.mxu0 0
    %520 = vmatpush1.bf16.xpose.msra.mxu0 0
    %521 = vmatprep.subr.bf16.mxu0 0
    %522 = vmatpush1.bf16.xpose.msra.mxu0 0
    %523 = vmatprep.subr.bf16.mxu0 0
    %524 = vmatpush1.bf16.xpose.msra.mxu0 0
    %525 = vmatprep.mubr.bf16.mxu0 0
    %526 = vmatmul.mubr.bf16.gmra.mrb[0].mxu0 %v488
    %v527 = vpop.f32.mrb[0].mxu0
    %v528 = vadd.f32 0.0, %v527
    %v529 = vpop.f32.mrb[0].mxu0
    %v530 = vpop.f32.mrb[0].mxu0
    %v531 = vpop.f32.mrb[0].mxu0
    %532 = vdwg.mxu0
    %v533 = vpack.c.b16 %v472, %v472
    %534 = vrot.lane.b32.xlu0 %v533, 96
    %v535 = vpop.permute.xlu0 %534
    %v536 = vpack.c.b16 %v476, %v476
    %537 = vrot.lane.b32.xlu0 %v536, 96
    %v538 = vpop.permute.xlu0 %537
    %v540 = vsel %vm94, %v535, 0
    %v543 = vsel %vm94, %v538, 0
    %545 = vmatprep.subr.bf16.mxu0 0
    %546 = vmatpush1.bf16.xpose.msra.mxu0 %v543
    %547 = vmatprep.subr.bf16.mxu0 0
    %548 = vmatpush1.bf16.xpose.msra.mxu0 0
    %549 = vmatprep.subr.bf16.mxu0 0
    %550 = vmatpush1.bf16.xpose.msra.mxu0 0
    %551 = vmatprep.subr.bf16.mxu0 0
    %552 = vmatpush1.bf16.xpose.msra.mxu0 0
    %553 = vmatprep.subr.bf16.mxu0 0
    %554 = vmatpush1.bf16.xpose.msra.mxu0 0
    %555 = vmatprep.subr.bf16.mxu0 0
    %556 = vmatpush1.bf16.xpose.msra.mxu0 0
    %557 = vmatprep.subr.bf16.mxu0 0
    %558 = vmatpush1.bf16.xpose.msra.mxu0 0
    %559 = vmatprep.subr.bf16.mxu0 0
    %560 = vmatpush1.bf16.xpose.msra.mxu0 0
    %561 = vmatprep.subr.bf16.mxu0 0
    %562 = vmatpush1.bf16.xpose.msra.mxu0 0
    %563 = vmatprep.subr.bf16.mxu0 0
    %564 = vmatpush1.bf16.xpose.msra.mxu0 0
    %565 = vmatprep.subr.bf16.mxu0 0
    %566 = vmatpush1.bf16.xpose.msra.mxu0 0
    %567 = vmatprep.subr.bf16.mxu0 0
    %568 = vmatpush1.bf16.xpose.msra.mxu0 0
    %569 = vmatprep.subr.bf16.mxu0 0
    %570 = vmatpush1.bf16.xpose.msra.mxu0 0
    %571 = vmatprep.subr.bf16.mxu0 0
    %572 = vmatpush1.bf16.xpose.msra.mxu0 0
    %573 = vmatprep.subr.bf16.mxu0 0
    %574 = vmatpush1.bf16.xpose.msra.mxu0 0
    %575 = vmatprep.subr.bf16.mxu0 0
    %576 = vmatpush1.bf16.xpose.msra.mxu0 0
    %577 = vmatprep.mubr.bf16.mxu0 0
    %578 = vmatmul.mubr.bf16.gmra.mrb[0].mxu0 %v540
    %v579 = vpop.f32.mrb[0].mxu0
    %v580 = vadd.f32 0.0, %v579
    %v581 = vpop.f32.mrb[0].mxu0
    %v582 = vpop.f32.mrb[0].mxu0
    %v583 = vpop.f32.mrb[0].mxu0
    %584 = vdwg.mxu0
    %v585 = vsel %vm349, %v528, -inf
    %586 = vmax.xlane.f32.xlu0 %v585
    %v587 = vpop.xlane.xlu0 %586
    %v588 = vsel %vm349, %v580, -inf
    %589 = vmax.xlane.f32.xlu0 %v588
    %v590 = vpop.xlane.xlu0 %589
    %v591 = vsub.f32 %v528, %v587
    %v592 = vsub.f32 %v580, %v590
    %v593 = vmul.f32 %v591, 1.442695
    %v594 = vpow.pop %v593
    %v595 = vmul.f32 %v592, 1.442695
    %v596 = vpow.pop %v595
    %v597 = vsel %vm349, %v594, 0.0
    %598 = vadd.xlane.f32.xlu0 %v597
    %v599 = vpop.xlane.xlu0 %598
    %v600 = vsel %vm349, %v596, 0.0
    %601 = vadd.xlane.f32.xlu0 %v600
    %v602 = vpop.xlane.xlu0 %601
    %v603 = vrcp.pop %v599
    %v604 = vrcp.pop %v602
    %v605 = vmul.f32 %v594, %v603
    %v606 = vmul.f32 %v596, %v604
    %v607 = vpack.c.bf16 %v605, %v605
    %v608 = vpack.c.bf16 %v606, %v606
    %v609 = vpack.c.b16 %v479, %v479
    %610 = vrot.lane.b32.xlu0 %v609, 96
    %v611 = vpop.permute.xlu0 %610
    %v613 = vsel %vm349, %v607, 0
    %v616 = vsel %vm377, %v611, 0
    %618 = vmatprep.subr.bf16.mxu0 0
    %619 = vmatpush1.bf16.msra.mxu0 %v616
    %620 = vmatprep.subr.bf16.mxu0 0
    %621 = vmatpush1.bf16.msra.mxu0 0
    %622 = vmatprep.subr.bf16.mxu0 0
    %623 = vmatpush1.bf16.msra.mxu0 0
    %624 = vmatprep.subr.bf16.mxu0 0
    %625 = vmatpush1.bf16.msra.mxu0 0
    %626 = vmatprep.subr.bf16.mxu0 0
    %627 = vmatpush1.bf16.msra.mxu0 0
    %628 = vmatprep.subr.bf16.mxu0 0
    %629 = vmatpush1.bf16.msra.mxu0 0
    %630 = vmatprep.subr.bf16.mxu0 0
    %631 = vmatpush1.bf16.msra.mxu0 0
    %632 = vmatprep.subr.bf16.mxu0 0
    %633 = vmatpush1.bf16.msra.mxu0 0
    %634 = vmatprep.subr.bf16.mxu0 0
    %635 = vmatpush1.bf16.msra.mxu0 0
    %636 = vmatprep.subr.bf16.mxu0 0
    %637 = vmatpush1.bf16.msra.mxu0 0
    %638 = vmatprep.subr.bf16.mxu0 0
    %639 = vmatpush1.bf16.msra.mxu0 0
    %640 = vmatprep.subr.bf16.mxu0 0
    %641 = vmatpush1.bf16.msra.mxu0 0
    %642 = vmatprep.subr.bf16.mxu0 0
    %643 = vmatpush1.bf16.msra.mxu0 0
    %644 = vmatprep.subr.bf16.mxu0 0
    %645 = vmatpush1.bf16.msra.mxu0 0
    %646 = vmatprep.subr.bf16.mxu0 0
    %647 = vmatpush1.bf16.msra.mxu0 0
    %648 = vmatprep.subr.bf16.mxu0 0
    %649 = vmatpush1.bf16.msra.mxu0 0
    %650 = vmatprep.mubr.bf16.mxu0 0
    %651 = vmatmul.mubr.bf16.gmra.mrb[0].mxu0 %v613
    %v652 = vpop.f32.mrb[0].mxu0
    %v653 = vadd.f32 0.0, %v652
    %v654 = vpop.f32.mrb[0].mxu0
    %v655 = vpop.f32.mrb[0].mxu0
    %v656 = vpop.f32.mrb[0].mxu0
    %657 = vdwg.mxu0
    %v658 = vpack.c.b16 %v480, %v480
    %659 = vrot.lane.b32.xlu0 %v658, 96
    %v660 = vpop.permute.xlu0 %659
    %v662 = vsel %vm349, %v608, 0
    %v665 = vsel %vm377, %v660, 0
    %667 = vmatprep.subr.bf16.mxu0 0
    %668 = vmatpush1.bf16.msra.mxu0 %v665
    %669 = vmatprep.subr.bf16.mxu0 0
    %670 = vmatpush1.bf16.msra.mxu0 0
    %671 = vmatprep.subr.bf16.mxu0 0
    %672 = vmatpush1.bf16.msra.mxu0 0
    %673 = vmatprep.subr.bf16.mxu0 0
    %674 = vmatpush1.bf16.msra.mxu0 0
    %675 = vmatprep.subr.bf16.mxu0 0
    %676 = vmatpush1.bf16.msra.mxu0 0
    %677 = vmatprep.subr.bf16.mxu0 0
    %678 = vmatpush1.bf16.msra.mxu0 0
    %679 = vmatprep.subr.bf16.mxu0 0
    %680 = vmatpush1.bf16.msra.mxu0 0
    %681 = vmatprep.subr.bf16.mxu0 0
    %682 = vmatpush1.bf16.msra.mxu0 0
    %683 = vmatprep.subr.bf16.mxu0 0
    %684 = vmatpush1.bf16.msra.mxu0 0
    %685 = vmatprep.subr.bf16.mxu0 0
    %686 = vmatpush1.bf16.msra.mxu0 0
    %687 = vmatprep.subr.bf16.mxu0 0
    %688 = vmatpush1.bf16.msra.mxu0 0
    %689 = vmatprep.subr.bf16.mxu0 0
    %690 = vmatpush1.bf16.msra.mxu0 0
    %691 = vmatprep.subr.bf16.mxu0 0
    %692 = vmatpush1.bf16.msra.mxu0 0
    %693 = vmatprep.subr.bf16.mxu0 0
    %694 = vmatpush1.bf16.msra.mxu0 0
    %695 = vmatprep.subr.bf16.mxu0 0
    %696 = vmatpush1.bf16.msra.mxu0 0
    %697 = vmatprep.subr.bf16.mxu0 0
    %698 = vmatpush1.bf16.msra.mxu0 0
    %699 = vmatprep.mubr.bf16.mxu0 0
    %700 = vmatmul.mubr.bf16.gmra.mrb[0].mxu0 %v662
    %v701 = vpop.f32.mrb[0].mxu0
    %v702 = vadd.f32 0.0, %v701
    %v703 = vpop.f32.mrb[0].mxu0
    %v704 = vpop.f32.mrb[0].mxu0
    %v705 = vpop.f32.mrb[0].mxu0
    %706 = vdwg.mxu0
    %709 = vrot.lane.b32.xlu0 %v653, 32
    %v710 = vpop.permute.xlu0 %709
    %711 = vrot.lane.b32.xlu0 %v702, 32
    %v712 = vpop.permute.xlu0 %711
    %vm715 = vcmask 523520
    %716 = vst.msk [vmem:[#allocation3] sm:$0xff] %vm715, %v710
    %717 = vst.msk [vmem:[#allocation3 + $0x10] sm:$0xff] %vm715, %v712
    %v718 = vld [vmem:[#allocation2] sm:$0xff]
    %v720 = vunpack.c.l.b16 %v718
    %v721 = vunpack.c.h.b16 %v718
    %v722 = vld [vmem:[#allocation2 + $0x10] sm:$0xff]
    %v724 = vunpack.c.l.b16 %v722
    %v725 = vunpack.c.h.b16 %v722
    %v726 = vld [vmem:[#allocation2 + $0x20] sm:$0xff]
    %v728 = vunpack.c.l.b16 %v726
    %v729 = vunpack.c.h.b16 %v726
    %v730 = vpack.c.b16 %v720, %v720
    %731 = vrot.lane.b32.xlu0 %v730, 64
    %v732 = vpop.permute.xlu0 %731
    %v733 = vpack.c.b16 %v724, %v724
    %734 = vrot.lane.b32.xlu0 %v733, 64
    %v735 = vpop.permute.xlu0 %734
    %v737 = vsel %vm94, %v732, 0
    %v740 = vsel %vm94, %v735, 0
    %742 = vmatprep.subr.bf16.mxu0 0
    %743 = vmatpush1.bf16.xpose.msra.mxu0 %v740
    %744 = vmatprep.subr.bf16.mxu0 0
    %745 = vmatpush1.bf16.xpose.msra.mxu0 0
    %746 = vmatprep.subr.bf16.mxu0 0
    %747 = vmatpush1.bf16.xpose.msra.mxu0 0
    %748 = vmatprep.subr.bf16.mxu0 0
    %749 = vmatpush1.bf16.xpose.msra.mxu0 0
    %750 = vmatprep.subr.bf16.mxu0 0
    %751 = vmatpush1.bf16.xpose.msra.mxu0 0
    %752 = vmatprep.subr.bf16.mxu0 0
    %753 = vmatpush1.bf16.xpose.msra.mxu0 0
    %754 = vmatprep.subr.bf16.mxu0 0
    %755 = vmatpush1.bf16.xpose.msra.mxu0 0
    %756 = vmatprep.subr.bf16.mxu0 0
    %757 = vmatpush1.bf16.xpose.msra.mxu0 0
    %758 = vmatprep.subr.bf16.mxu0 0
    %759 = vmatpush1.bf16.xpose.msra.mxu0 0
    %760 = vmatprep.subr.bf16.mxu0 0
    %761 = vmatpush1.bf16.xpose.msra.mxu0 0
    %762 = vmatprep.subr.bf16.mxu0 0
    %763 = vmatpush1.bf16.xpose.msra.mxu0 0
    %764 = vmatprep.subr.bf16.mxu0 0
    %765 = vmatpush1.bf16.xpose.msra.mxu0 0
    %766 = vmatprep.subr.bf16.mxu0 0
    %767 = vmatpush1.bf16.xpose.msra.mxu0 0
    %768 = vmatprep.subr.bf16.mxu0 0
    %769 = vmatpush1.bf16.xpose.msra.mxu0 0
    %770 = vmatprep.subr.bf16.mxu0 0
    %771 = vmatpush1.bf16.xpose.msra.mxu0 0
    %772 = vmatprep.subr.bf16.mxu0 0
    %773 = vmatpush1.bf16.xpose.msra.mxu0 0
    %774 = vmatprep.mubr.bf16.mxu0 0
    %775 = vmatmul.mubr.bf16.gmra.mrb[0].mxu0 %v737
    %v776 = vpop.f32.mrb[0].mxu0
    %v777 = vadd.f32 0.0, %v776
    %v778 = vpop.f32.mrb[0].mxu0
    %v779 = vpop.f32.mrb[0].mxu0
    %v780 = vpop.f32.mrb[0].mxu0
    %781 = vdwg.mxu0
    %v782 = vpack.c.b16 %v721, %v721
    %783 = vrot.lane.b32.xlu0 %v782, 64
    %v784 = vpop.permute.xlu0 %783
    %v785 = vpack.c.b16 %v725, %v725
    %786 = vrot.lane.b32.xlu0 %v785, 64
    %v787 = vpop.permute.xlu0 %786
    %v789 = vsel %vm94, %v784, 0
    %v792 = vsel %vm94, %v787, 0
    %794 = vmatprep.subr.bf16.mxu0 0
    %795 = vmatpush1.bf16.xpose.msra.mxu0 %v792
    %796 = vmatprep.subr.bf16.mxu0 0
    %797 = vmatpush1.bf16.xpose.msra.mxu0 0
    %798 = vmatprep.subr.bf16.mxu0 0
    %799 = vmatpush1.bf16.xpose.msra.mxu0 0
    %800 = vmatprep.subr.bf16.mxu0 0
    %801 = vmatpush1.bf16.xpose.msra.mxu0 0
    %802 = vmatprep.subr.bf16.mxu0 0
    %803 = vmatpush1.bf16.xpose.msra.mxu0 0
    %804 = vmatprep.subr.bf16.mxu0 0
    %805 = vmatpush1.bf16.xpose.msra.mxu0 0
    %806 = vmatprep.subr.bf16.mxu0 0
    %807 = vmatpush1.bf16.xpose.msra.mxu0 0
    %808 = vmatprep.subr.bf16.mxu0 0
    %809 = vmatpush1.bf16.xpose.msra.mxu0 0
    %810 = vmatprep.subr.bf16.mxu0 0
    %811 = vmatpush1.bf16.xpose.msra.mxu0 0
    %812 = vmatprep.subr.bf16.mxu0 0
    %813 = vmatpush1.bf16.xpose.msra.mxu0 0
    %814 = vmatprep.subr.bf16.mxu0 0
    %815 = vmatpush1.bf16.xpose.msra.mxu0 0
    %816 = vmatprep.subr.bf16.mxu0 0
    %817 = vmatpush1.bf16.xpose.msra.mxu0 0
    %818 = vmatprep.subr.bf16.mxu0 0
    %819 = vmatpush1.bf16.xpose.msra.mxu0 0
    %820 = vmatprep.subr.bf16.mxu0 0
    %821 = vmatpush1.bf16.xpose.msra.mxu0 0
    %822 = vmatprep.subr.bf16.mxu0 0
    %823 = vmatpush1.bf16.xpose.msra.mxu0 0
    %824 = vmatprep.subr.bf16.mxu0 0
    %825 = vmatpush1.bf16.xpose.msra.mxu0 0
    %826 = vmatprep.mubr.bf16.mxu0 0
    %827 = vmatmul.mubr.bf16.gmra.mrb[0].mxu0 %v789
    %v828 = vpop.f32.mrb[0].mxu0
    %v829 = vadd.f32 0.0, %v828
    %v830 = vpop.f32.mrb[0].mxu0
    %v831 = vpop.f32.mrb[0].mxu0
    %v832 = vpop.f32.mrb[0].mxu0
    %833 = vdwg.mxu0
    %v834 = vsel %vm349, %v777, -inf
    %835 = vmax.xlane.f32.xlu0 %v834
    %v836 = vpop.xlane.xlu0 %835
    %v837 = vsel %vm349, %v829, -inf
    %838 = vmax.xlane.f32.xlu0 %v837
    %v839 = vpop.xlane.xlu0 %838
    %v840 = vsub.f32 %v777, %v836
    %v841 = vsub.f32 %v829, %v839
    %v842 = vmul.f32 %v840, 1.442695
    %v843 = vpow.pop %v842
    %v844 = vmul.f32 %v841, 1.442695
    %v845 = vpow.pop %v844
    %v846 = vsel %vm349, %v843, 0.0
    %847 = vadd.xlane.f32.xlu0 %v846
    %v848 = vpop.xlane.xlu0 %847
    %v849 = vsel %vm349, %v845, 0.0
    %850 = vadd.xlane.f32.xlu0 %v849
    %v851 = vpop.xlane.xlu0 %850
    %v852 = vrcp.pop %v848
    %v853 = vrcp.pop %v851
    %v854 = vmul.f32 %v843, %v852
    %v855 = vmul.f32 %v845, %v853
    %v856 = vpack.c.bf16 %v854, %v854
    %v857 = vpack.c.bf16 %v855, %v855
    %v858 = vpack.c.b16 %v728, %v728
    %859 = vrot.lane.b32.xlu0 %v858, 64
    %v860 = vpop.permute.xlu0 %859
    %v862 = vsel %vm349, %v856, 0
    %v865 = vsel %vm377, %v860, 0
    %867 = vmatprep.subr.bf16.mxu0 0
    %868 = vmatpush1.bf16.msra.mxu0 %v865
    %869 = vmatprep.subr.bf16.mxu0 0
    %870 = vmatpush1.bf16.msra.mxu0 0
    %871 = vmatprep.subr.bf16.mxu0 0
    %872 = vmatpush1.bf16.msra.mxu0 0
    %873 = vmatprep.subr.bf16.mxu0 0
    %874 = vmatpush1.bf16.msra.mxu0 0
    %875 = vmatprep.subr.bf16.mxu0 0
    %876 = vmatpush1.bf16.msra.mxu0 0
    %877 = vmatprep.subr.bf16.mxu0 0
    %878 = vmatpush1.bf16.msra.mxu0 0
    %879 = vmatprep.subr.bf16.mxu0 0
    %880 = vmatpush1.bf16.msra.mxu0 0
    %881 = vmatprep.subr.bf16.mxu0 0
    %882 = vmatpush1.bf16.msra.mxu0 0
    %883 = vmatprep.subr.bf16.mxu0 0
    %884 = vmatpush1.bf16.msra.mxu0 0
    %885 = vmatprep.subr.bf16.mxu0 0
    %886 = vmatpush1.bf16.msra.mxu0 0
    %887 = vmatprep.subr.bf16.mxu0 0
    %888 = vmatpush1.bf16.msra.mxu0 0
    %889 = vmatprep.subr.bf16.mxu0 0
    %890 = vmatpush1.bf16.msra.mxu0 0
    %891 = vmatprep.subr.bf16.mxu0 0
    %892 = vmatpush1.bf16.msra.mxu0 0
    %893 = vmatprep.subr.bf16.mxu0 0
    %894 = vmatpush1.bf16.msra.mxu0 0
    %895 = vmatprep.subr.bf16.mxu0 0
    %896 = vmatpush1.bf16.msra.mxu0 0
    %897 = vmatprep.subr.bf16.mxu0 0
    %898 = vmatpush1.bf16.msra.mxu0 0
    %899 = vmatprep.mubr.bf16.mxu0 0
    %900 = vmatmul.mubr.bf16.gmra.mrb[0].mxu0 %v862
    %v901 = vpop.f32.mrb[0].mxu0
    %v902 = vadd.f32 0.0, %v901
    %v903 = vpop.f32.mrb[0].mxu0
    %v904 = vpop.f32.mrb[0].mxu0
    %v905 = vpop.f32.mrb[0].mxu0
    %906 = vdwg.mxu0
    %v907 = vpack.c.b16 %v729, %v729
    %908 = vrot.lane.b32.xlu0 %v907, 64
    %v909 = vpop.permute.xlu0 %908
    %v911 = vsel %vm349, %v857, 0
    %v914 = vsel %vm377, %v909, 0
    %916 = vmatprep.subr.bf16.mxu0 0
    %917 = vmatpush1.bf16.msra.mxu0 %v914
    %918 = vmatprep.subr.bf16.mxu0 0
    %919 = vmatpush1.bf16.msra.mxu0 0
    %920 = vmatprep.subr.bf16.mxu0 0
    %921 = vmatpush1.bf16.msra.mxu0 0
    %922 = vmatprep.subr.bf16.mxu0 0
    %923 = vmatpush1.bf16.msra.mxu0 0
    %924 = vmatprep.subr.bf16.mxu0 0
    %925 = vmatpush1.bf16.msra.mxu0 0
    %926 = vmatprep.subr.bf16.mxu0 0
    %927 = vmatpush1.bf16.msra.mxu0 0
    %928 = vmatprep.subr.bf16.mxu0 0
    %929 = vmatpush1.bf16.msra.mxu0 0
    %930 = vmatprep.subr.bf16.mxu0 0
    %931 = vmatpush1.bf16.msra.mxu0 0
    %932 = vmatprep.subr.bf16.mxu0 0
    %933 = vmatpush1.bf16.msra.mxu0 0
    %934 = vmatprep.subr.bf16.mxu0 0
    %935 = vmatpush1.bf16.msra.mxu0 0
    %936 = vmatprep.subr.bf16.mxu0 0
    %937 = vmatpush1.bf16.msra.mxu0 0
    %938 = vmatprep.subr.bf16.mxu0 0
    %939 = vmatpush1.bf16.msra.mxu0 0
    %940 = vmatprep.subr.bf16.mxu0 0
    %941 = vmatpush1.bf16.msra.mxu0 0
    %942 = vmatprep.subr.bf16.mxu0 0
    %943 = vmatpush1.bf16.msra.mxu0 0
    %944 = vmatprep.subr.bf16.mxu0 0
    %945 = vmatpush1.bf16.msra.mxu0 0
    %946 = vmatprep.subr.bf16.mxu0 0
    %947 = vmatpush1.bf16.msra.mxu0 0
    %948 = vmatprep.mubr.bf16.mxu0 0
    %949 = vmatmul.mubr.bf16.gmra.mrb[0].mxu0 %v911
    %v950 = vpop.f32.mrb[0].mxu0
    %v951 = vadd.f32 0.0, %v950
    %v952 = vpop.f32.mrb[0].mxu0
    %v953 = vpop.f32.mrb[0].mxu0
    %v954 = vpop.f32.mrb[0].mxu0
    %955 = vdwg.mxu0
    %958 = vrot.lane.b32.xlu0 %v902, 64
    %v959 = vpop.permute.xlu0 %958
    %960 = vrot.lane.b32.xlu0 %v951, 64
    %v961 = vpop.permute.xlu0 %960
    %vm964 = vcmask 785920
    %965 = vst.msk [vmem:[#allocation3] sm:$0xff] %vm964, %v959
    %966 = vst.msk [vmem:[#allocation3 + $0x10] sm:$0xff] %vm964, %v961
    %v967 = vld [vmem:[#allocation2] sm:$0xff]
    %v969 = vunpack.c.l.b16 %v967
    %v970 = vunpack.c.h.b16 %v967
    %v971 = vld [vmem:[#allocation2 + $0x10] sm:$0xff]
    %v973 = vunpack.c.l.b16 %v971
    %v974 = vunpack.c.h.b16 %v971
    %v975 = vld [vmem:[#allocation2 + $0x20] sm:$0xff]
    %v977 = vunpack.c.l.b16 %v975
    %v978 = vunpack.c.h.b16 %v975
    %v979 = vpack.c.b16 %v969, %v969
    %980 = vrot.lane.b32.xlu0 %v979, 32
    %v981 = vpop.permute.xlu0 %980
    %v982 = vpack.c.b16 %v973, %v973
    %983 = vrot.lane.b32.xlu0 %v982, 32
    %v984 = vpop.permute.xlu0 %983
    %v986 = vsel %vm94, %v981, 0
    %v989 = vsel %vm94, %v984, 0
    %991 = vmatprep.subr.bf16.mxu0 0
    %992 = vmatpush1.bf16.xpose.msra.mxu0 %v989
    %993 = vmatprep.subr.bf16.mxu0 0
    %994 = vmatpush1.bf16.xpose.msra.mxu0 0
    %995 = vmatprep.subr.bf16.mxu0 0
    %996 = vmatpush1.bf16.xpose.msra.mxu0 0
    %997 = vmatprep.subr.bf16.mxu0 0
    %998 = vmatpush1.bf16.xpose.msra.mxu0 0
    %999 = vmatprep.subr.bf16.mxu0 0
    %1000 = vmatpush1.bf16.xpose.msra.mxu0 0
    %1001 = vmatprep.subr.bf16.mxu0 0
    %1002 = vmatpush1.bf16.xpose.msra.mxu0 0
    %1003 = vmatprep.subr.bf16.mxu0 0
    %1004 = vmatpush1.bf16.xpose.msra.mxu0 0
    %1005 = vmatprep.subr.bf16.mxu0 0
    %1006 = vmatpush1.bf16.xpose.msra.mxu0 0
    %1007 = vmatprep.subr.bf16.mxu0 0
    %1008 = vmatpush1.bf16.xpose.msra.mxu0 0
    %1009 = vmatprep.subr.bf16.mxu0 0
    %1010 = vmatpush1.bf16.xpose.msra.mxu0 0
    %1011 = vmatprep.subr.bf16.mxu0 0
    %1012 = vmatpush1.bf16.xpose.msra.mxu0 0
    %1013 = vmatprep.subr.bf16.mxu0 0
    %1014 = vmatpush1.bf16.xpose.msra.mxu0 0
    %1015 = vmatprep.subr.bf16.mxu0 0
    %1016 = vmatpush1.bf16.xpose.msra.mxu0 0
    %1017 = vmatprep.subr.bf16.mxu0 0
    %1018 = vmatpush1.bf16.xpose.msra.mxu0 0
    %1019 = vmatprep.subr.bf16.mxu0 0
    %1020 = vmatpush1.bf16.xpose.msra.mxu0 0
    %1021 = vmatprep.subr.bf16.mxu0 0
    %1022 = vmatpush1.bf16.xpose.msra.mxu0 0
    %1023 = vmatprep.mubr.bf16.mxu0 0
    %1024 = vmatmul.mubr.bf16.gmra.mrb[0].mxu0 %v986
    %v1025 = vpop.f32.mrb[0].mxu0
    %v1026 = vadd.f32 0.0, %v1025
    %v1027 = vpop.f32.mrb[0].mxu0
    %v1028 = vpop.f32.mrb[0].mxu0
    %v1029 = vpop.f32.mrb[0].mxu0
    %1030 = vdwg.mxu0
    %v1031 = vpack.c.b16 %v970, %v970
    %1032 = vrot.lane.b32.xlu0 %v1031, 32
    %v1033 = vpop.permute.xlu0 %1032
    %v1034 = vpack.c.b16 %v974, %v974
    %1035 = vrot.lane.b32.xlu0 %v1034, 32
    %v1036 = vpop.permute.xlu0 %1035
    %v1038 = vsel %vm94, %v1033, 0
    %v1041 = vsel %vm94, %v1036, 0
    %1043 = vmatprep.subr.bf16.mxu0 0
    %1044 = vmatpush1.bf16.xpose.msra.mxu0 %v1041
    %1045 = vmatprep.subr.bf16.mxu0 0
    %1046 = vmatpush1.bf16.xpose.msra.mxu0 0
    %1047 = vmatprep.subr.bf16.mxu0 0
    %1048 = vmatpush1.bf16.xpose.msra.mxu0 0
    %1049 = vmatprep.subr.bf16.mxu0 0
    %1050 = vmatpush1.bf16.xpose.msra.mxu0 0
    %1051 = vmatprep.subr.bf16.mxu0 0
    %1052 = vmatpush1.bf16.xpose.msra.mxu0 0
    %1053 = vmatprep.subr.bf16.mxu0 0
    %1054 = vmatpush1.bf16.xpose.msra.mxu0 0
    %1055 = vmatprep.subr.bf16.mxu0 0
    %1056 = vmatpush1.bf16.xpose.msra.mxu0 0
    %1057 = vmatprep.subr.bf16.mxu0 0
    %1058 = vmatpush1.bf16.xpose.msra.mxu0 0
    %1059 = vmatprep.subr.bf16.mxu0 0
    %1060 = vmatpush1.bf16.xpose.msra.mxu0 0
    %1061 = vmatprep.subr.bf16.mxu0 0
    %1062 = vmatpush1.bf16.xpose.msra.mxu0 0
    %1063 = vmatprep.subr.bf16.mxu0 0
    %1064 = vmatpush1.bf16.xpose.msra.mxu0 0
    %1065 = vmatprep.subr.bf16.mxu0 0
    %1066 = vmatpush1.bf16.xpose.msra.mxu0 0
    %1067 = vmatprep.subr.bf16.mxu0 0
    %1068 = vmatpush1.bf16.xpose.msra.mxu0 0
    %1069 = vmatprep.subr.bf16.mxu0 0
    %1070 = vmatpush1.bf16.xpose.msra.mxu0 0
    %1071 = vmatprep.subr.bf16.mxu0 0
    %1072 = vmatpush1.bf16.xpose.msra.mxu0 0
    %1073 = vmatprep.subr.bf16.mxu0 0
    %1074 = vmatpush1.bf16.xpose.msra.mxu0 0
    %1075 = vmatprep.mubr.bf16.mxu0 0
    %1076 = vmatmul.mubr.bf16.gmra.mrb[0].mxu0 %v1038
    %v1077 = vpop.f32.mrb[0].mxu0
    %v1078 = vadd.f32 0.0, %v1077
    %v1079 = vpop.f32.mrb[0].mxu0
    %v1080 = vpop.f32.mrb[0].mxu0
    %v1081 = vpop.f32.mrb[0].mxu0
    %1082 = vdwg.mxu0
    %v1083 = vsel %vm349, %v1026, -inf
    %1084 = vmax.xlane.f32.xlu0 %v1083
    %v1085 = vpop.xlane.xlu0 %1084
    %v1086 = vsel %vm349, %v1078, -inf
    %1087 = vmax.xlane.f32.xlu0 %v1086
    %v1088 = vpop.xlane.xlu0 %1087
    %v1089 = vsub.f32 %v1026, %v1085
    %v1090 = vsub.f32 %v1078, %v1088
    %v1091 = vmul.f32 %v1089, 1.442695
    %v1092 = vpow.pop %v1091
    %v1093 = vmul.f32 %v1090, 1.442695
    %v1094 = vpow.pop %v1093
    %v1095 = vsel %vm349, %v1092, 0.0
    %1096 = vadd.xlane.f32.xlu0 %v1095
    %v1097 = vpop.xlane.xlu0 %1096
    %v1098 = vsel %vm349, %v1094, 0.0
    %1099 = vadd.xlane.f32.xlu0 %v1098
    %v1100 = vpop.xlane.xlu0 %1099
    %v1101 = vrcp.pop %v1097
    %v1102 = vrcp.pop %v1100
    %v1103 = vmul.f32 %v1092, %v1101
    %v1104 = vmul.f32 %v1094, %v1102
    %v1105 = vpack.c.bf16 %v1103, %v1103
    %v1106 = vpack.c.bf16 %v1104, %v1104
    %v1107 = vpack.c.b16 %v977, %v977
    %1108 = vrot.lane.b32.xlu0 %v1107, 32
    %v1109 = vpop.permute.xlu0 %1108
    %v1111 = vsel %vm349, %v1105, 0
    %v1114 = vsel %vm377, %v1109, 0
    %1116 = vmatprep.subr.bf16.mxu0 0
    %1117 = vmatpush1.bf16.msra.mxu0 %v1114
    %1118 = vmatprep.subr.bf16.mxu0 0
    %1119 = vmatpush1.bf16.msra.mxu0 0
    %1120 = vmatprep.subr.bf16.mxu0 0
    %1121 = vmatpush1.bf16.msra.mxu0 0
    %1122 = vmatprep.subr.bf16.mxu0 0
    %1123 = vmatpush1.bf16.msra.mxu0 0
    %1124 = vmatprep.subr.bf16.mxu0 0
    %1125 = vmatpush1.bf16.msra.mxu0 0
    %1126 = vmatprep.subr.bf16.mxu0 0
    %1127 = vmatpush1.bf16.msra.mxu0 0
    %1128 = vmatprep.subr.bf16.mxu0 0
    %1129 = vmatpush1.bf16.msra.mxu0 0
    %1130 = vmatprep.subr.bf16.mxu0 0
    %1131 = vmatpush1.bf16.msra.mxu0 0
    %1132 = vmatprep.subr.bf16.mxu0 0
    %1133 = vmatpush1.bf16.msra.mxu0 0
    %1134 = vmatprep.subr.bf16.mxu0 0
    %1135 = vmatpush1.bf16.msra.mxu0 0
    %1136 = vmatprep.subr.bf16.mxu0 0
    %1137 = vmatpush1.bf16.msra.mxu0 0
    %1138 = vmatprep.subr.bf16.mxu0 0
    %1139 = vmatpush1.bf16.msra.mxu0 0
    %1140 = vmatprep.subr.bf16.mxu0 0
    %1141 = vmatpush1.bf16.msra.mxu0 0
    %1142 = vmatprep.subr.bf16.mxu0 0
    %1143 = vmatpush1.bf16.msra.mxu0 0
    %1144 = vmatprep.subr.bf16.mxu0 0
    %1145 = vmatpush1.bf16.msra.mxu0 0
    %1146 = vmatprep.subr.bf16.mxu0 0
    %1147 = vmatpush1.bf16.msra.mxu0 0
    %1148 = vmatprep.mubr.bf16.mxu0 0
    %1149 = vmatmul.mubr.bf16.gmra.mrb[0].mxu0 %v1111
    %v1150 = vpop.f32.mrb[0].mxu0
    %v1151 = vadd.f32 0.0, %v1150
    %v1152 = vpop.f32.mrb[0].mxu0
    %v1153 = vpop.f32.mrb[0].mxu0
    %v1154 = vpop.f32.mrb[0].mxu0
    %1155 = vdwg.mxu0
    %v1156 = vpack.c.b16 %v978, %v978
    %1157 = vrot.lane.b32.xlu0 %v1156, 32
    %v1158 = vpop.permute.xlu0 %1157
    %v1160 = vsel %vm349, %v1106, 0
    %v1163 = vsel %vm377, %v1158, 0
    %1165 = vmatprep.subr.bf16.mxu0 0
    %1166 = vmatpush1.bf16.msra.mxu0 %v1163
    %1167 = vmatprep.subr.bf16.mxu0 0
    %1168 = vmatpush1.bf16.msra.mxu0 0
    %1169 = vmatprep.subr.bf16.mxu0 0
    %1170 = vmatpush1.bf16.msra.mxu0 0
    %1171 = vmatprep.subr.bf16.mxu0 0
    %1172 = vmatpush1.bf16.msra.mxu0 0
    %1173 = vmatprep.subr.bf16.mxu0 0
    %1174 = vmatpush1.bf16.msra.mxu0 0
    %1175 = vmatprep.subr.bf16.mxu0 0
    %1176 = vmatpush1.bf16.msra.mxu0 0
    %1177 = vmatprep.subr.bf16.mxu0 0
    %1178 = vmatpush1.bf16.msra.mxu0 0
    %1179 = vmatprep.subr.bf16.mxu0 0
    %1180 = vmatpush1.bf16.msra.mxu0 0
    %1181 = vmatprep.subr.bf16.mxu0 0
    %1182 = vmatpush1.bf16.msra.mxu0 0
    %1183 = vmatprep.subr.bf16.mxu0 0
    %1184 = vmatpush1.bf16.msra.mxu0 0
    %1185 = vmatprep.subr.bf16.mxu0 0
    %1186 = vmatpush1.bf16.msra.mxu0 0
    %1187 = vmatprep.subr.bf16.mxu0 0
    %1188 = vmatpush1.bf16.msra.mxu0 0
    %1189 = vmatprep.subr.bf16.mxu0 0
    %1190 = vmatpush1.bf16.msra.mxu0 0
    %1191 = vmatprep.subr.bf16.mxu0 0
    %1192 = vmatpush1.bf16.msra.mxu0 0
    %1193 = vmatprep.subr.bf16.mxu0 0
    %1194 = vmatpush1.bf16.msra.mxu0 0
    %1195 = vmatprep.subr.bf16.mxu0 0
    %1196 = vmatpush1.bf16.msra.mxu0 0
    %1197 = vmatprep.mubr.bf16.mxu0 0
    %1198 = vmatmul.mubr.bf16.gmra.mrb[0].mxu0 %v1160
    %v1199 = vpop.f32.mrb[0].mxu0
    %v1200 = vadd.f32 0.0, %v1199
    %v1201 = vpop.f32.mrb[0].mxu0
    %v1202 = vpop.f32.mrb[0].mxu0
    %v1203 = vpop.f32.mrb[0].mxu0
    %1204 = vdwg.mxu0
    %1207 = vrot.lane.b32.xlu0 %v1151, 96
    %v1208 = vpop.permute.xlu0 %1207
    %1209 = vrot.lane.b32.xlu0 %v1200, 96
    %v1210 = vpop.permute.xlu0 %1209
    %vm1213 = vcmask 1048320
    %1214 = vst.msk [vmem:[#allocation3] sm:$0xff] %vm1213, %v1208
    %1215 = vst.msk [vmem:[#allocation3 + $0x10] sm:$0xff] %vm1213, %v1210
    %v1216 = vld [vmem:[#allocation2 + $0x8] sm:$0xff]
    %v1218 = vunpack.c.l.b16 %v1216
    %v1219 = vunpack.c.h.b16 %v1216
    %v1220 = vpack.c.b16 %v1218, %v1218
    %v1221 = vpack.c.b16 %v1219, %v1219
    %v1222 = vld [vmem:[#allocation2 + $0x18] sm:$0xff]
    %v1224 = vunpack.c.l.b16 %v1222
    %v1225 = vunpack.c.h.b16 %v1222
    %v1226 = vpack.c.b16 %v1224, %v1224
    %v1227 = vpack.c.b16 %v1225, %v1225
    %v1228 = vld [vmem:[#allocation2 + $0x28] sm:$0xff]
    %v1230 = vunpack.c.l.b16 %v1228
    %v1231 = vunpack.c.h.b16 %v1228
    %v1232 = vpack.c.b16 %v1230, %v1230
    %v1233 = vpack.c.b16 %v1231, %v1231
    %v1235 = vsel %vm94, %v1220, 0
    %v1238 = vsel %vm94, %v1226, 0
    %1240 = vmatprep.subr.bf16.mxu0 0
    %1241 = vmatpush1.bf16.xpose.msra.mxu0 %v1238
    %1242 = vmatprep.subr.bf16.mxu0 0
    %1243 = vmatpush1.bf16.xpose.msra.mxu0 0
    %1244 = vmatprep.subr.bf16.mxu0 0
    %1245 = vmatpush1.bf16.xpose.msra.mxu0 0
    %1246 = vmatprep.subr.bf16.mxu0 0
    %1247 = vmatpush1.bf16.xpose.msra.mxu0 0
    %1248 = vmatprep.subr.bf16.mxu0 0
    %1249 = vmatpush1.bf16.xpose.msra.mxu0 0
    %1250 = vmatprep.subr.bf16.mxu0 0
    %1251 = vmatpush1.bf16.xpose.msra.mxu0 0
    %1252 = vmatprep.subr.bf16.mxu0 0
    %1253 = vmatpush1.bf16.xpose.msra.mxu0 0
    %1254 = vmatprep.subr.bf16.mxu0 0
    %1255 = vmatpush1.bf16.xpose.msra.mxu0 0
    %1256 = vmatprep.subr.bf16.mxu0 0
    %1257 = vmatpush1.bf16.xpose.msra.mxu0 0
    %1258 = vmatprep.subr.bf16.mxu0 0
    %1259 = vmatpush1.bf16.xpose.msra.mxu0 0
    %1260 = vmatprep.subr.bf16.mxu0 0
    %1261 = vmatpush1.bf16.xpose.msra.mxu0 0
    %1262 = vmatprep.subr.bf16.mxu0 0
    %1263 = vmatpush1.bf16.xpose.msra.mxu0 0
    %1264 = vmatprep.subr.bf16.mxu0 0
    %1265 = vmatpush1.bf16.xpose.msra.mxu0 0
    %1266 = vmatprep.subr.bf16.mxu0 0
    %1267 = vmatpush1.bf16.xpose.msra.mxu0 0
    %1268 = vmatprep.subr.bf16.mxu0 0
    %1269 = vmatpush1.bf16.xpose.msra.mxu0 0
    %1270 = vmatprep.subr.bf16.mxu0 0
    %1271 = vmatpush1.bf16.xpose.msra.mxu0 0
    %1272 = vmatprep.mubr.bf16.mxu0 0
    %1273 = vmatmul.mubr.bf16.gmra.mrb[0].mxu0 %v1235
    %v1274 = vpop.f32.mrb[0].mxu0
    %v1275 = vadd.f32 0.0, %v1274
    %v1276 = vpop.f32.mrb[0].mxu0
    %v1277 = vpop.f32.mrb[0].mxu0
    %v1278 = vpop.f32.mrb[0].mxu0
    %1279 = vdwg.mxu0
    %v1281 = vsel %vm94, %v1221, 0
    %v1284 = vsel %vm94, %v1227, 0
    %1286 = vmatprep.subr.bf16.mxu0 0
    %1287 = vmatpush1.bf16.xpose.msra.mxu0 %v1284
    %1288 = vmatprep.subr.bf16.mxu0 0
    %1289 = vmatpush1.bf16.xpose.msra.mxu0 0
    %1290 = vmatprep.subr.bf16.mxu0 0
    %1291 = vmatpush1.bf16.xpose.msra.mxu0 0
    %1292 = vmatprep.subr.bf16.mxu0 0
    %1293 = vmatpush1.bf16.xpose.msra.mxu0 0
    %1294 = vmatprep.subr.bf16.mxu0 0
    %1295 = vmatpush1.bf16.xpose.msra.mxu0 0
    %1296 = vmatprep.subr.bf16.mxu0 0
    %1297 = vmatpush1.bf16.xpose.msra.mxu0 0
    %1298 = vmatprep.subr.bf16.mxu0 0
    %1299 = vmatpush1.bf16.xpose.msra.mxu0 0
    %1300 = vmatprep.subr.bf16.mxu0 0
    %1301 = vmatpush1.bf16.xpose.msra.mxu0 0
    %1302 = vmatprep.subr.bf16.mxu0 0
    %1303 = vmatpush1.bf16.xpose.msra.mxu0 0
    %1304 = vmatprep.subr.bf16.mxu0 0
    %1305 = vmatpush1.bf16.xpose.msra.mxu0 0
    %1306 = vmatprep.subr.bf16.mxu0 0
    %1307 = vmatpush1.bf16.xpose.msra.mxu0 0
    %1308 = vmatprep.subr.bf16.mxu0 0
    %1309 = vmatpush1.bf16.xpose.msra.mxu0 0
    %1310 = vmatprep.subr.bf16.mxu0 0
    %1311 = vmatpush1.bf16.xpose.msra.mxu0 0
    %1312 = vmatprep.subr.bf16.mxu0 0
    %1313 = vmatpush1.bf16.xpose.msra.mxu0 0
    %1314 = vmatprep.subr.bf16.mxu0 0
    %1315 = vmatpush1.bf16.xpose.msra.mxu0 0
    %1316 = vmatprep.subr.bf16.mxu0 0
    %1317 = vmatpush1.bf16.xpose.msra.mxu0 0
    %1318 = vmatprep.mubr.bf16.mxu0 0
    %1319 = vmatmul.mubr.bf16.gmra.mrb[0].mxu0 %v1281
    %v1320 = vpop.f32.mrb[0].mxu0
    %v1321 = vadd.f32 0.0, %v1320
    %v1322 = vpop.f32.mrb[0].mxu0
    %v1323 = vpop.f32.mrb[0].mxu0
    %v1324 = vpop.f32.mrb[0].mxu0
    %1325 = vdwg.mxu0
    %v1326 = vsel %vm349, %v1275, -inf
    %1327 = vmax.xlane.f32.xlu0 %v1326
    %v1328 = vpop.xlane.xlu0 %1327
    %v1329 = vsel %vm349, %v1321, -inf
    %1330 = vmax.xlane.f32.xlu0 %v1329
    %v1331 = vpop.xlane.xlu0 %1330
    %v1332 = vsub.f32 %v1275, %v1328
    %v1333 = vsub.f32 %v1321, %v1331
    %v1334 = vmul.f32 %v1332, 1.442695
    %v1335 = vpow.pop %v1334
    %v1336 = vmul.f32 %v1333, 1.442695
    %v1337 = vpow.pop %v1336
    %v1338 = vsel %vm349, %v1335, 0.0
    %1339 = vadd.xlane.f32.xlu0 %v1338
    %v1340 = vpop.xlane.xlu0 %1339
    %v1341 = vsel %vm349, %v1337, 0.0
    %1342 = vadd.xlane.f32.xlu0 %v1341
    %v1343 = vpop.xlane.xlu0 %1342
    %v1344 = vrcp.pop %v1340
    %v1345 = vrcp.pop %v1343
    %v1346 = vmul.f32 %v1335, %v1344
    %v1347 = vmul.f32 %v1337, %v1345
    %v1348 = vpack.c.bf16 %v1346, %v1346
    %v1349 = vpack.c.bf16 %v1347, %v1347
    %v1351 = vsel %vm349, %v1348, 0
    %v1354 = vsel %vm377, %v1232, 0
    %1356 = vmatprep.subr.bf16.mxu0 0
    %1357 = vmatpush1.bf16.msra.mxu0 %v1354
    %1358 = vmatprep.subr.bf16.mxu0 0
    %1359 = vmatpush1.bf16.msra.mxu0 0
    %1360 = vmatprep.subr.bf16.mxu0 0
    %1361 = vmatpush1.bf16.msra.mxu0 0
    %1362 = vmatprep.subr.bf16.mxu0 0
    %1363 = vmatpush1.bf16.msra.mxu0 0
    %1364 = vmatprep.subr.bf16.mxu0 0
    %1365 = vmatpush1.bf16.msra.mxu0 0
    %1366 = vmatprep.subr.bf16.mxu0 0
    %1367 = vmatpush1.bf16.msra.mxu0 0
    %1368 = vmatprep.subr.bf16.mxu0 0
    %1369 = vmatpush1.bf16.msra.mxu0 0
    %1370 = vmatprep.subr.bf16.mxu0 0
    %1371 = vmatpush1.bf16.msra.mxu0 0
    %1372 = vmatprep.subr.bf16.mxu0 0
    %1373 = vmatpush1.bf16.msra.mxu0 0
    %1374 = vmatprep.subr.bf16.mxu0 0
    %1375 = vmatpush1.bf16.msra.mxu0 0
    %1376 = vmatprep.subr.bf16.mxu0 0
    %1377 = vmatpush1.bf16.msra.mxu0 0
    %1378 = vmatprep.subr.bf16.mxu0 0
    %1379 = vmatpush1.bf16.msra.mxu0 0
    %1380 = vmatprep.subr.bf16.mxu0 0
    %1381 = vmatpush1.bf16.msra.mxu0 0
    %1382 = vmatprep.subr.bf16.mxu0 0
    %1383 = vmatpush1.bf16.msra.mxu0 0
    %1384 = vmatprep.subr.bf16.mxu0 0
    %1385 = vmatpush1.bf16.msra.mxu0 0
    %1386 = vmatprep.subr.bf16.mxu0 0
    %1387 = vmatpush1.bf16.msra.mxu0 0
    %1388 = vmatprep.mubr.bf16.mxu0 0
    %1389 = vmatmul.mubr.bf16.gmra.mrb[0].mxu0 %v1351
    %v1390 = vpop.f32.mrb[0].mxu0
    %v1391 = vadd.f32 0.0, %v1390
    %v1392 = vpop.f32.mrb[0].mxu0
    %v1393 = vpop.f32.mrb[0].mxu0
    %v1394 = vpop.f32.mrb[0].mxu0
    %1395 = vdwg.mxu0
    %v1397 = vsel %vm349, %v1349, 0
    %v1400 = vsel %vm377, %v1233, 0
    %1402 = vmatprep.subr.bf16.mxu0 0
    %1403 = vmatpush1.bf16.msra.mxu0 %v1400
    %1404 = vmatprep.subr.bf16.mxu0 0
    %1405 = vmatpush1.bf16.msra.mxu0 0
    %1406 = vmatprep.subr.bf16.mxu0 0
    %1407 = vmatpush1.bf16.msra.mxu0 0
    %1408 = vmatprep.subr.bf16.mxu0 0
    %1409 = vmatpush1.bf16.msra.mxu0 0
    %1410 = vmatprep.subr.bf16.mxu0 0
    %1411 = vmatpush1.bf16.msra.mxu0 0
    %1412 = vmatprep.subr.bf16.mxu0 0
    %1413 = vmatpush1.bf16.msra.mxu0 0
    %1414 = vmatprep.subr.bf16.mxu0 0
    %1415 = vmatpush1.bf16.msra.mxu0 0
    %1416 = vmatprep.subr.bf16.mxu0 0
    %1417 = vmatpush1.bf16.msra.mxu0 0
    %1418 = vmatprep.subr.bf16.mxu0 0
    %1419 = vmatpush1.bf16.msra.mxu0 0
    %1420 = vmatprep.subr.bf16.mxu0 0
    %1421 = vmatpush1.bf16.msra.mxu0 0
    %1422 = vmatprep.subr.bf16.mxu0 0
    %1423 = vmatpush1.bf16.msra.mxu0 0
    %1424 = vmatprep.subr.bf16.mxu0 0
    %1425 = vmatpush1.bf16.msra.mxu0 0
    %1426 = vmatprep.subr.bf16.mxu0 0
    %1427 = vmatpush1.bf16.msra.mxu0 0
    %1428 = vmatprep.subr.bf16.mxu0 0
    %1429 = vmatpush1.bf16.msra.mxu0 0
    %1430 = vmatprep.subr.bf16.mxu0 0
    %1431 = vmatpush1.bf16.msra.mxu0 0
    %1432 = vmatprep.subr.bf16.mxu0 0
    %1433 = vmatpush1.bf16.msra.mxu0 0
    %1434 = vmatprep.mubr.bf16.mxu0 0
    %1435 = vmatmul.mubr.bf16.gmra.mrb[0].mxu0 %v1397
    %v1436 = vpop.f32.mrb[0].mxu0
    %v1437 = vadd.f32 0.0, %v1436
    %v1438 = vpop.f32.mrb[0].mxu0
    %v1439 = vpop.f32.mrb[0].mxu0
    %v1440 = vpop.f32.mrb[0].mxu0
    %1441 = vdwg.mxu0
    %1442 = vst.msk [vmem:[#allocation3 + $0x8] sm:$0xff] %vm94, %v1391
    %1443 = vst.msk [vmem:[#allocation3 + $0x18] sm:$0xff] %vm94, %v1437
    %v1444 = vld [vmem:[#allocation2 + $0x8] sm:$0xff]
    %v1446 = vunpack.c.l.b16 %v1444
    %v1447 = vunpack.c.h.b16 %v1444
    %v1448 = vld [vmem:[#allocation2 + $0x18] sm:$0xff]
    %v1450 = vunpack.c.l.b16 %v1448
    %v1451 = vunpack.c.h.b16 %v1448
    %v1452 = vld [vmem:[#allocation2 + $0x28] sm:$0xff]
    %v1454 = vunpack.c.l.b16 %v1452
    %v1455 = vunpack.c.h.b16 %v1452
    %v1456 = vpack.c.b16 %v1446, %v1446
    %1457 = vrot.lane.b32.xlu0 %v1456, 96
    %v1458 = vpop.permute.xlu0 %1457
    %v1459 = vpack.c.b16 %v1450, %v1450
    %1460 = vrot.lane.b32.xlu0 %v1459, 96
    %v1461 = vpop.permute.xlu0 %1460
    %v1463 = vsel %vm94, %v1458, 0
    %v1466 = vsel %vm94, %v1461, 0
    %1468 = vmatprep.subr.bf16.mxu0 0
    %1469 = vmatpush1.bf16.xpose.msra.mxu0 %v1466
    %1470 = vmatprep.subr.bf16.mxu0 0
    %1471 = vmatpush1.bf16.xpose.msra.mxu0 0
    %1472 = vmatprep.subr.bf16.mxu0 0
    %1473 = vmatpush1.bf16.xpose.msra.mxu0 0
    %1474 = vmatprep.subr.bf16.mxu0 0
    %1475 = vmatpush1.bf16.xpose.msra.mxu0 0
    %1476 = vmatprep.subr.bf16.mxu0 0
    %1477 = vmatpush1.bf16.xpose.msra.mxu0 0
    %1478 = vmatprep.subr.bf16.mxu0 0
    %1479 = vmatpush1.bf16.xpose.msra.mxu0 0
    %1480 = vmatprep.subr.bf16.mxu0 0
    %1481 = vmatpush1.bf16.xpose.msra.mxu0 0
    %1482 = vmatprep.subr.bf16.mxu0 0
    %1483 = vmatpush1.bf16.xpose.msra.mxu0 0
    %1484 = vmatprep.subr.bf16.mxu0 0
    %1485 = vmatpush1.bf16.xpose.msra.mxu0 0
    %1486 = vmatprep.subr.bf16.mxu0 0
    %1487 = vmatpush1.bf16.xpose.msra.mxu0 0
    %1488 = vmatprep.subr.bf16.mxu0 0
    %1489 = vmatpush1.bf16.xpose.msra.mxu0 0
    %1490 = vmatprep.subr.bf16.mxu0 0
    %1491 = vmatpush1.bf16.xpose.msra.mxu0 0
    %1492 = vmatprep.subr.bf16.mxu0 0
    %1493 = vmatpush1.bf16.xpose.msra.mxu0 0
    %1494 = vmatprep.subr.bf16.mxu0 0
    %1495 = vmatpush1.bf16.xpose.msra.mxu0 0
    %1496 = vmatprep.subr.bf16.mxu0 0
    %1497 = vmatpush1.bf16.xpose.msra.mxu0 0
    %1498 = vmatprep.subr.bf16.mxu0 0
    %1499 = vmatpush1.bf16.xpose.msra.mxu0 0
    %1500 = vmatprep.mubr.bf16.mxu0 0
    %1501 = vmatmul.mubr.bf16.gmra.mrb[0].mxu0 %v1463
    %v1502 = vpop.f32.mrb[0].mxu0
    %v1503 = vadd.f32 0.0, %v1502
    %v1504 = vpop.f32.mrb[0].mxu0
    %v1505 = vpop.f32.mrb[0].mxu0
    %v1506 = vpop.f32.mrb[0].mxu0
    %1507 = vdwg.mxu0
    %v1508 = vpack.c.b16 %v1447, %v1447
    %1509 = vrot.lane.b32.xlu0 %v1508, 96
    %v1510 = vpop.permute.xlu0 %1509
    %v1511 = vpack.c.b16 %v1451, %v1451
    %1512 = vrot.lane.b32.xlu0 %v1511, 96
    %v1513 = vpop.permute.xlu0 %1512
    %v1515 = vsel %vm94, %v1510, 0
    %v1518 = vsel %vm94, %v1513, 0
    %1520 = vmatprep.subr.bf16.mxu0 0
    %1521 = vmatpush1.bf16.xpose.msra.mxu0 %v1518
    %1522 = vmatprep.subr.bf16.mxu0 0
    %1523 = vmatpush1.bf16.xpose.msra.mxu0 0
    %1524 = vmatprep.subr.bf16.mxu0 0
    %1525 = vmatpush1.bf16.xpose.msra.mxu0 0
    %1526 = vmatprep.subr.bf16.mxu0 0
    %1527 = vmatpush1.bf16.xpose.msra.mxu0 0
    %1528 = vmatprep.subr.bf16.mxu0 0
    %1529 = vmatpush1.bf16.xpose.msra.mxu0 0
    %1530 = vmatprep.subr.bf16.mxu0 0
    %1531 = vmatpush1.bf16.xpose.msra.mxu0 0
    %1532 = vmatprep.subr.bf16.mxu0 0
    %1533 = vmatpush1.bf16.xpose.msra.mxu0 0
    %1534 = vmatprep.subr.bf16.mxu0 0
    %1535 = vmatpush1.bf16.xpose.msra.mxu0 0
    %1536 = vmatprep.subr.bf16.mxu0 0
    %1537 = vmatpush1.bf16.xpose.msra.mxu0 0
    %1538 = vmatprep.subr.bf16.mxu0 0
    %1539 = vmatpush1.bf16.xpose.msra.mxu0 0
    %1540 = vmatprep.subr.bf16.mxu0 0
    %1541 = vmatpush1.bf16.xpose.msra.mxu0 0
    %1542 = vmatprep.subr.bf16.mxu0 0
    %1543 = vmatpush1.bf16.xpose.msra.mxu0 0
    %1544 = vmatprep.subr.bf16.mxu0 0
    %1545 = vmatpush1.bf16.xpose.msra.mxu0 0
    %1546 = vmatprep.subr.bf16.mxu0 0
    %1547 = vmatpush1.bf16.xpose.msra.mxu0 0
    %1548 = vmatprep.subr.bf16.mxu0 0
    %1549 = vmatpush1.bf16.xpose.msra.mxu0 0
    %1550 = vmatprep.subr.bf16.mxu0 0
    %1551 = vmatpush1.bf16.xpose.msra.mxu0 0
    %1552 = vmatprep.mubr.bf16.mxu0 0
    %1553 = vmatmul.mubr.bf16.gmra.mrb[0].mxu0 %v1515
    %v1554 = vpop.f32.mrb[0].mxu0
    %v1555 = vadd.f32 0.0, %v1554
    %v1556 = vpop.f32.mrb[0].mxu0
    %v1557 = vpop.f32.mrb[0].mxu0
    %v1558 = vpop.f32.mrb[0].mxu0
    %1559 = vdwg.mxu0
    %v1560 = vsel %vm349, %v1503, -inf
    %1561 = vmax.xlane.f32.xlu0 %v1560
    %v1562 = vpop.xlane.xlu0 %1561
    %v1563 = vsel %vm349, %v1555, -inf
    %1564 = vmax.xlane.f32.xlu0 %v1563
    %v1565 = vpop.xlane.xlu0 %1564
    %v1566 = vsub.f32 %v1503, %v1562
    %v1567 = vsub.f32 %v1555, %v1565
    %v1568 = vmul.f32 %v1566, 1.442695
    %v1569 = vpow.pop %v1568
    %v1570 = vmul.f32 %v1567, 1.442695
    %v1571 = vpow.pop %v1570
    %v1572 = vsel %vm349, %v1569, 0.0
    %1573 = vadd.xlane.f32.xlu0 %v1572
    %v1574 = vpop.xlane.xlu0 %1573
    %v1575 = vsel %vm349, %v1571, 0.0
    %1576 = vadd.xlane.f32.xlu0 %v1575
    %v1577 = vpop.xlane.xlu0 %1576
    %v1578 = vrcp.pop %v1574
    %v1579 = vrcp.pop %v1577
    %v1580 = vmul.f32 %v1569, %v1578
    %v1581 = vmul.f32 %v1571, %v1579
    %v1582 = vpack.c.bf16 %v1580, %v1580
    %v1583 = vpack.c.bf16 %v1581, %v1581
    %v1584 = vpack.c.b16 %v1454, %v1454
    %1585 = vrot.lane.b32.xlu0 %v1584, 96
    %v1586 = vpop.permute.xlu0 %1585
    %v1588 = vsel %vm349, %v1582, 0
    %v1591 = vsel %vm377, %v1586, 0
    %1593 = vmatprep.subr.bf16.mxu0 0
    %1594 = vmatpush1.bf16.msra.mxu0 %v1591
    %1595 = vmatprep.subr.bf16.mxu0 0
    %1596 = vmatpush1.bf16.msra.mxu0 0
    %1597 = vmatprep.subr.bf16.mxu0 0
    %1598 = vmatpush1.bf16.msra.mxu0 0
    %1599 = vmatprep.subr.bf16.mxu0 0
    %1600 = vmatpush1.bf16.msra.mxu0 0
    %1601 = vmatprep.subr.bf16.mxu0 0
    %1602 = vmatpush1.bf16.msra.mxu0 0
    %1603 = vmatprep.subr.bf16.mxu0 0
    %1604 = vmatpush1.bf16.msra.mxu0 0
    %1605 = vmatprep.subr.bf16.mxu0 0
    %1606 = vmatpush1.bf16.msra.mxu0 0
    %1607 = vmatprep.subr.bf16.mxu0 0
    %1608 = vmatpush1.bf16.msra.mxu0 0
    %1609 = vmatprep.subr.bf16.mxu0 0
    %1610 = vmatpush1.bf16.msra.mxu0 0
    %1611 = vmatprep.subr.bf16.mxu0 0
    %1612 = vmatpush1.bf16.msra.mxu0 0
    %1613 = vmatprep.subr.bf16.mxu0 0
    %1614 = vmatpush1.bf16.msra.mxu0 0
    %1615 = vmatprep.subr.bf16.mxu0 0
    %1616 = vmatpush1.bf16.msra.mxu0 0
    %1617 = vmatprep.subr.bf16.mxu0 0
    %1618 = vmatpush1.bf16.msra.mxu0 0
    %1619 = vmatprep.subr.bf16.mxu0 0
    %1620 = vmatpush1.bf16.msra.mxu0 0
    %1621 = vmatprep.subr.bf16.mxu0 0
    %1622 = vmatpush1.bf16.msra.mxu0 0
    %1623 = vmatprep.subr.bf16.mxu0 0
    %1624 = vmatpush1.bf16.msra.mxu0 0
    %1625 = vmatprep.mubr.bf16.mxu0 0
    %1626 = vmatmul.mubr.bf16.gmra.mrb[0].mxu0 %v1588
    %v1627 = vpop.f32.mrb[0].mxu0
    %v1628 = vadd.f32 0.0, %v1627
    %v1629 = vpop.f32.mrb[0].mxu0
    %v1630 = vpop.f32.mrb[0].mxu0
    %v1631 = vpop.f32.mrb[0].mxu0
    %1632 = vdwg.mxu0
    %v1633 = vpack.c.b16 %v1455, %v1455
    %1634 = vrot.lane.b32.xlu0 %v1633, 96
    %v1635 = vpop.permute.xlu0 %1634
    %v1637 = vsel %vm349, %v1583, 0
    %v1640 = vsel %vm377, %v1635, 0
    %1642 = vmatprep.subr.bf16.mxu0 0
    %1643 = vmatpush1.bf16.msra.mxu0 %v1640
    %1644 = vmatprep.subr.bf16.mxu0 0
    %1645 = vmatpush1.bf16.msra.mxu0 0
    %1646 = vmatprep.subr.bf16.mxu0 0
    %1647 = vmatpush1.bf16.msra.mxu0 0
    %1648 = vmatprep.subr.bf16.mxu0 0
    %1649 = vmatpush1.bf16.msra.mxu0 0
    %1650 = vmatprep.subr.bf16.mxu0 0
    %1651 = vmatpush1.bf16.msra.mxu0 0
    %1652 = vmatprep.subr.bf16.mxu0 0
    %1653 = vmatpush1.bf16.msra.mxu0 0
    %1654 = vmatprep.subr.bf16.mxu0 0
    %1655 = vmatpush1.bf16.msra.mxu0 0
    %1656 = vmatprep.subr.bf16.mxu0 0
    %1657 = vmatpush1.bf16.msra.mxu0 0
    %1658 = vmatprep.subr.bf16.mxu0 0
    %1659 = vmatpush1.bf16.msra.mxu0 0
    %1660 = vmatprep.subr.bf16.mxu0 0
    %1661 = vmatpush1.bf16.msra.mxu0 0
    %1662 = vmatprep.subr.bf16.mxu0 0
    %1663 = vmatpush1.bf16.msra.mxu0 0
    %1664 = vmatprep.subr.bf16.mxu0 0
    %1665 = vmatpush1.bf16.msra.mxu0 0
    %1666 = vmatprep.subr.bf16.mxu0 0
    %1667 = vmatpush1.bf16.msra.mxu0 0
    %1668 = vmatprep.subr.bf16.mxu0 0
    %1669 = vmatpush1.bf16.msra.mxu0 0
    %1670 = vmatprep.subr.bf16.mxu0 0
    %1671 = vmatpush1.bf16.msra.mxu0 0
    %1672 = vmatprep.subr.bf16.mxu0 0
    %1673 = vmatpush1.bf16.msra.mxu0 0
    %1674 = vmatprep.mubr.bf16.mxu0 0
    %1675 = vmatmul.mubr.bf16.gmra.mrb[0].mxu0 %v1637
    %v1676 = vpop.f32.mrb[0].mxu0
    %v1677 = vadd.f32 0.0, %v1676
    %v1678 = vpop.f32.mrb[0].mxu0
    %v1679 = vpop.f32.mrb[0].mxu0
    %v1680 = vpop.f32.mrb[0].mxu0
    %1681 = vdwg.mxu0
    %1684 = vrot.lane.b32.xlu0 %v1628, 32
    %v1685 = vpop.permute.xlu0 %1684
    %1686 = vrot.lane.b32.xlu0 %v1677, 32
    %v1687 = vpop.permute.xlu0 %1686
    %1690 = vst.msk [vmem:[#allocation3 + $0x8] sm:$0xff] %vm715, %v1685
    %1691 = vst.msk [vmem:[#allocation3 + $0x18] sm:$0xff] %vm715, %v1687
    %v1692 = vld [vmem:[#allocation2 + $0x8] sm:$0xff]
    %v1694 = vunpack.c.l.b16 %v1692
    %v1695 = vunpack.c.h.b16 %v1692
    %v1696 = vld [vmem:[#allocation2 + $0x18] sm:$0xff]
    %v1698 = vunpack.c.l.b16 %v1696
    %v1699 = vunpack.c.h.b16 %v1696
    %v1700 = vld [vmem:[#allocation2 + $0x28] sm:$0xff]
    %v1702 = vunpack.c.l.b16 %v1700
    %v1703 = vunpack.c.h.b16 %v1700
    %v1704 = vpack.c.b16 %v1694, %v1694
    %1705 = vrot.lane.b32.xlu0 %v1704, 64
    %v1706 = vpop.permute.xlu0 %1705
    %v1707 = vpack.c.b16 %v1698, %v1698
    %1708 = vrot.lane.b32.xlu0 %v1707, 64
    %v1709 = vpop.permute.xlu0 %1708
    %v1711 = vsel %vm94, %v1706, 0
    %v1714 = vsel %vm94, %v1709, 0
    %1716 = vmatprep.subr.bf16.mxu0 0
    %1717 = vmatpush1.bf16.xpose.msra.mxu0 %v1714
    %1718 = vmatprep.subr.bf16.mxu0 0
    %1719 = vmatpush1.bf16.xpose.msra.mxu0 0
    %1720 = vmatprep.subr.bf16.mxu0 0
    %1721 = vmatpush1.bf16.xpose.msra.mxu0 0
    %1722 = vmatprep.subr.bf16.mxu0 0
    %1723 = vmatpush1.bf16.xpose.msra.mxu0 0
    %1724 = vmatprep.subr.bf16.mxu0 0
    %1725 = vmatpush1.bf16.xpose.msra.mxu0 0
    %1726 = vmatprep.subr.bf16.mxu0 0
    %1727 = vmatpush1.bf16.xpose.msra.mxu0 0
    %1728 = vmatprep.subr.bf16.mxu0 0
    %1729 = vmatpush1.bf16.xpose.msra.mxu0 0
    %1730 = vmatprep.subr.bf16.mxu0 0
    %1731 = vmatpush1.bf16.xpose.msra.mxu0 0
    %1732 = vmatprep.subr.bf16.mxu0 0
    %1733 = vmatpush1.bf16.xpose.msra.mxu0 0
    %1734 = vmatprep.subr.bf16.mxu0 0
    %1735 = vmatpush1.bf16.xpose.msra.mxu0 0
    %1736 = vmatprep.subr.bf16.mxu0 0
    %1737 = vmatpush1.bf16.xpose.msra.mxu0 0
    %1738 = vmatprep.subr.bf16.mxu0 0
    %1739 = vmatpush1.bf16.xpose.msra.mxu0 0
    %1740 = vmatprep.subr.bf16.mxu0 0
    %1741 = vmatpush1.bf16.xpose.msra.mxu0 0
    %1742 = vmatprep.subr.bf16.mxu0 0
    %1743 = vmatpush1.bf16.xpose.msra.mxu0 0
    %1744 = vmatprep.subr.bf16.mxu0 0
    %1745 = vmatpush1.bf16.xpose.msra.mxu0 0
    %1746 = vmatprep.subr.bf16.mxu0 0
    %1747 = vmatpush1.bf16.xpose.msra.mxu0 0
    %1748 = vmatprep.mubr.bf16.mxu0 0
    %1749 = vmatmul.mubr.bf16.gmra.mrb[0].mxu0 %v1711
    %v1750 = vpop.f32.mrb[0].mxu0
    %v1751 = vadd.f32 0.0, %v1750
    %v1752 = vpop.f32.mrb[0].mxu0
    %v1753 = vpop.f32.mrb[0].mxu0
    %v1754 = vpop.f32.mrb[0].mxu0
    %1755 = vdwg.mxu0
    %v1756 = vpack.c.b16 %v1695, %v1695
    %1757 = vrot.lane.b32.xlu0 %v1756, 64
    %v1758 = vpop.permute.xlu0 %1757
    %v1759 = vpack.c.b16 %v1699, %v1699
    %1760 = vrot.lane.b32.xlu0 %v1759, 64
    %v1761 = vpop.permute.xlu0 %1760
    %v1763 = vsel %vm94, %v1758, 0
    %v1766 = vsel %vm94, %v1761, 0
    %1768 = vmatprep.subr.bf16.mxu0 0
    %1769 = vmatpush1.bf16.xpose.msra.mxu0 %v1766
    %1770 = vmatprep.subr.bf16.mxu0 0
    %1771 = vmatpush1.bf16.xpose.msra.mxu0 0
    %1772 = vmatprep.subr.bf16.mxu0 0
    %1773 = vmatpush1.bf16.xpose.msra.mxu0 0
    %1774 = vmatprep.subr.bf16.mxu0 0
    %1775 = vmatpush1.bf16.xpose.msra.mxu0 0
    %1776 = vmatprep.subr.bf16.mxu0 0
    %1777 = vmatpush1.bf16.xpose.msra.mxu0 0
    %1778 = vmatprep.subr.bf16.mxu0 0
    %1779 = vmatpush1.bf16.xpose.msra.mxu0 0
    %1780 = vmatprep.subr.bf16.mxu0 0
    %1781 = vmatpush1.bf16.xpose.msra.mxu0 0
    %1782 = vmatprep.subr.bf16.mxu0 0
    %1783 = vmatpush1.bf16.xpose.msra.mxu0 0
    %1784 = vmatprep.subr.bf16.mxu0 0
    %1785 = vmatpush1.bf16.xpose.msra.mxu0 0
    %1786 = vmatprep.subr.bf16.mxu0 0
    %1787 = vmatpush1.bf16.xpose.msra.mxu0 0
    %1788 = vmatprep.subr.bf16.mxu0 0
    %1789 = vmatpush1.bf16.xpose.msra.mxu0 0
    %1790 = vmatprep.subr.bf16.mxu0 0
    %1791 = vmatpush1.bf16.xpose.msra.mxu0 0
    %1792 = vmatprep.subr.bf16.mxu0 0
    %1793 = vmatpush1.bf16.xpose.msra.mxu0 0
    %1794 = vmatprep.subr.bf16.mxu0 0
    %1795 = vmatpush1.bf16.xpose.msra.mxu0 0
    %1796 = vmatprep.subr.bf16.mxu0 0
    %1797 = vmatpush1.bf16.xpose.msra.mxu0 0
    %1798 = vmatprep.subr.bf16.mxu0 0
    %1799 = vmatpush1.bf16.xpose.msra.mxu0 0
    %1800 = vmatprep.mubr.bf16.mxu0 0
    %1801 = vmatmul.mubr.bf16.gmra.mrb[0].mxu0 %v1763
    %v1802 = vpop.f32.mrb[0].mxu0
    %v1803 = vadd.f32 0.0, %v1802
    %v1804 = vpop.f32.mrb[0].mxu0
    %v1805 = vpop.f32.mrb[0].mxu0
    %v1806 = vpop.f32.mrb[0].mxu0
    %1807 = vdwg.mxu0
    %v1808 = vsel %vm349, %v1751, -inf
    %1809 = vmax.xlane.f32.xlu0 %v1808
    %v1810 = vpop.xlane.xlu0 %1809
    %v1811 = vsel %vm349, %v1803, -inf
    %1812 = vmax.xlane.f32.xlu0 %v1811
    %v1813 = vpop.xlane.xlu0 %1812
    %v1814 = vsub.f32 %v1751, %v1810
    %v1815 = vsub.f32 %v1803, %v1813
    %v1816 = vmul.f32 %v1814, 1.442695
    %v1817 = vpow.pop %v1816
    %v1818 = vmul.f32 %v1815, 1.442695
    %v1819 = vpow.pop %v1818
    %v1820 = vsel %vm349, %v1817, 0.0
    %1821 = vadd.xlane.f32.xlu0 %v1820
    %v1822 = vpop.xlane.xlu0 %1821
    %v1823 = vsel %vm349, %v1819, 0.0
    %1824 = vadd.xlane.f32.xlu0 %v1823
    %v1825 = vpop.xlane.xlu0 %1824
    %v1826 = vrcp.pop %v1822
    %v1827 = vrcp.pop %v1825
    %v1828 = vmul.f32 %v1817, %v1826
    %v1829 = vmul.f32 %v1819, %v1827
    %v1830 = vpack.c.bf16 %v1828, %v1828
    %v1831 = vpack.c.bf16 %v1829, %v1829
    %v1832 = vpack.c.b16 %v1702, %v1702
    %1833 = vrot.lane.b32.xlu0 %v1832, 64
    %v1834 = vpop.permute.xlu0 %1833
    %v1836 = vsel %vm349, %v1830, 0
    %v1839 = vsel %vm377, %v1834, 0
    %1841 = vmatprep.subr.bf16.mxu0 0
    %1842 = vmatpush1.bf16.msra.mxu0 %v1839
    %1843 = vmatprep.subr.bf16.mxu0 0
    %1844 = vmatpush1.bf16.msra.mxu0 0
    %1845 = vmatprep.subr.bf16.mxu0 0
    %1846 = vmatpush1.bf16.msra.mxu0 0
    %1847 = vmatprep.subr.bf16.mxu0 0
    %1848 = vmatpush1.bf16.msra.mxu0 0
    %1849 = vmatprep.subr.bf16.mxu0 0
    %1850 = vmatpush1.bf16.msra.mxu0 0
    %1851 = vmatprep.subr.bf16.mxu0 0
    %1852 = vmatpush1.bf16.msra.mxu0 0
    %1853 = vmatprep.subr.bf16.mxu0 0
    %1854 = vmatpush1.bf16.msra.mxu0 0
    %1855 = vmatprep.subr.bf16.mxu0 0
    %1856 = vmatpush1.bf16.msra.mxu0 0
    %1857 = vmatprep.subr.bf16.mxu0 0
    %1858 = vmatpush1.bf16.msra.mxu0 0
    %1859 = vmatprep.subr.bf16.mxu0 0
    %1860 = vmatpush1.bf16.msra.mxu0 0
    %1861 = vmatprep.subr.bf16.mxu0 0
    %1862 = vmatpush1.bf16.msra.mxu0 0
    %1863 = vmatprep.subr.bf16.mxu0 0
    %1864 = vmatpush1.bf16.msra.mxu0 0
    %1865 = vmatprep.subr.bf16.mxu0 0
    %1866 = vmatpush1.bf16.msra.mxu0 0
    %1867 = vmatprep.subr.bf16.mxu0 0
    %1868 = vmatpush1.bf16.msra.mxu0 0
    %1869 = vmatprep.subr.bf16.mxu0 0
    %1870 = vmatpush1.bf16.msra.mxu0 0
    %1871 = vmatprep.subr.bf16.mxu0 0
    %1872 = vmatpush1.bf16.msra.mxu0 0
    %1873 = vmatprep.mubr.bf16.mxu0 0
    %1874 = vmatmul.mubr.bf16.gmra.mrb[0].mxu0 %v1836
    %v1875 = vpop.f32.mrb[0].mxu0
    %v1876 = vadd.f32 0.0, %v1875
    %v1877 = vpop.f32.mrb[0].mxu0
    %v1878 = vpop.f32.mrb[0].mxu0
    %v1879 = vpop.f32.mrb[0].mxu0
    %1880 = vdwg.mxu0
    %v1881 = vpack.c.b16 %v1703, %v1703
    %1882 = vrot.lane.b32.xlu0 %v1881, 64
    %v1883 = vpop.permute.xlu0 %1882
    %v1885 = vsel %vm349, %v1831, 0
    %v1888 = vsel %vm377, %v1883, 0
    %1890 = vmatprep.subr.bf16.mxu0 0
    %1891 = vmatpush1.bf16.msra.mxu0 %v1888
    %1892 = vmatprep.subr.bf16.mxu0 0
    %1893 = vmatpush1.bf16.msra.mxu0 0
    %1894 = vmatprep.subr.bf16.mxu0 0
    %1895 = vmatpush1.bf16.msra.mxu0 0
    %1896 = vmatprep.subr.bf16.mxu0 0
    %1897 = vmatpush1.bf16.msra.mxu0 0
    %1898 = vmatprep.subr.bf16.mxu0 0
    %1899 = vmatpush1.bf16.msra.mxu0 0
    %1900 = vmatprep.subr.bf16.mxu0 0
    %1901 = vmatpush1.bf16.msra.mxu0 0
    %1902 = vmatprep.subr.bf16.mxu0 0
    %1903 = vmatpush1.bf16.msra.mxu0 0
    %1904 = vmatprep.subr.bf16.mxu0 0
    %1905 = vmatpush1.bf16.msra.mxu0 0
    %1906 = vmatprep.subr.bf16.mxu0 0
    %1907 = vmatpush1.bf16.msra.mxu0 0
    %1908 = vmatprep.subr.bf16.mxu0 0
    %1909 = vmatpush1.bf16.msra.mxu0 0
    %1910 = vmatprep.subr.bf16.mxu0 0
    %1911 = vmatpush1.bf16.msra.mxu0 0
    %1912 = vmatprep.subr.bf16.mxu0 0
    %1913 = vmatpush1.bf16.msra.mxu0 0
    %1914 = vmatprep.subr.bf16.mxu0 0
    %1915 = vmatpush1.bf16.msra.mxu0 0
    %1916 = vmatprep.subr.bf16.mxu0 0
    %1917 = vmatpush1.bf16.msra.mxu0 0
    %1918 = vmatprep.subr.bf16.mxu0 0
    %1919 = vmatpush1.bf16.msra.mxu0 0
    %1920 = vmatprep.subr.bf16.mxu0 0
    %1921 = vmatpush1.bf16.msra.mxu0 0
    %1922 = vmatprep.mubr.bf16.mxu0 0
    %1923 = vmatmul.mubr.bf16.gmra.mrb[0].mxu0 %v1885
    %v1924 = vpop.f32.mrb[0].mxu0
    %v1925 = vadd.f32 0.0, %v1924
    %v1926 = vpop.f32.mrb[0].mxu0
    %v1927 = vpop.f32.mrb[0].mxu0
    %v1928 = vpop.f32.mrb[0].mxu0
    %1929 = vdwg.mxu0
    %1932 = vrot.lane.b32.xlu0 %v1876, 64
    %v1933 = vpop.permute.xlu0 %1932
    %1934 = vrot.lane.b32.xlu0 %v1925, 64
    %v1935 = vpop.permute.xlu0 %1934
    %1938 = vst.msk [vmem:[#allocation3 + $0x8] sm:$0xff] %vm964, %v1933
    %1939 = vst.msk [vmem:[#allocation3 + $0x18] sm:$0xff] %vm964, %v1935
    %v1940 = vld [vmem:[#allocation2 + $0x8] sm:$0xff]
    %v1942 = vunpack.c.l.b16 %v1940
    %v1943 = vunpack.c.h.b16 %v1940
    %v1944 = vld [vmem:[#allocation2 + $0x18] sm:$0xff]
    %v1946 = vunpack.c.l.b16 %v1944
    %v1947 = vunpack.c.h.b16 %v1944
    %v1948 = vld [vmem:[#allocation2 + $0x28] sm:$0xff]
    %v1950 = vunpack.c.l.b16 %v1948
    %v1951 = vunpack.c.h.b16 %v1948
    %v1952 = vpack.c.b16 %v1942, %v1942
    %1953 = vrot.lane.b32.xlu0 %v1952, 32
    %v1954 = vpop.permute.xlu0 %1953
    %v1955 = vpack.c.b16 %v1946, %v1946
    %1956 = vrot.lane.b32.xlu0 %v1955, 32
    %v1957 = vpop.permute.xlu0 %1956
    %v1959 = vsel %vm94, %v1954, 0
    %v1962 = vsel %vm94, %v1957, 0
    %1964 = vmatprep.subr.bf16.mxu0 0
    %1965 = vmatpush1.bf16.xpose.msra.mxu0 %v1962
    %1966 = vmatprep.subr.bf16.mxu0 0
    %1967 = vmatpush1.bf16.xpose.msra.mxu0 0
    %1968 = vmatprep.subr.bf16.mxu0 0
    %1969 = vmatpush1.bf16.xpose.msra.mxu0 0
    %1970 = vmatprep.subr.bf16.mxu0 0
    %1971 = vmatpush1.bf16.xpose.msra.mxu0 0
    %1972 = vmatprep.subr.bf16.mxu0 0
    %1973 = vmatpush1.bf16.xpose.msra.mxu0 0
    %1974 = vmatprep.subr.bf16.mxu0 0
    %1975 = vmatpush1.bf16.xpose.msra.mxu0 0
    %1976 = vmatprep.subr.bf16.mxu0 0
    %1977 = vmatpush1.bf16.xpose.msra.mxu0 0
    %1978 = vmatprep.subr.bf16.mxu0 0
    %1979 = vmatpush1.bf16.xpose.msra.mxu0 0
    %1980 = vmatprep.subr.bf16.mxu0 0
    %1981 = vmatpush1.bf16.xpose.msra.mxu0 0
    %1982 = vmatprep.subr.bf16.mxu0 0
    %1983 = vmatpush1.bf16.xpose.msra.mxu0 0
    %1984 = vmatprep.subr.bf16.mxu0 0
    %1985 = vmatpush1.bf16.xpose.msra.mxu0 0
    %1986 = vmatprep.subr.bf16.mxu0 0
    %1987 = vmatpush1.bf16.xpose.msra.mxu0 0
    %1988 = vmatprep.subr.bf16.mxu0 0
    %1989 = vmatpush1.bf16.xpose.msra.mxu0 0
    %1990 = vmatprep.subr.bf16.mxu0 0
    %1991 = vmatpush1.bf16.xpose.msra.mxu0 0
    %1992 = vmatprep.subr.bf16.mxu0 0
    %1993 = vmatpush1.bf16.xpose.msra.mxu0 0
    %1994 = vmatprep.subr.bf16.mxu0 0
    %1995 = vmatpush1.bf16.xpose.msra.mxu0 0
    %1996 = vmatprep.mubr.bf16.mxu0 0
    %1997 = vmatmul.mubr.bf16.gmra.mrb[0].mxu0 %v1959
    %v1998 = vpop.f32.mrb[0].mxu0
    %v1999 = vadd.f32 0.0, %v1998
    %v2000 = vpop.f32.mrb[0].mxu0
    %v2001 = vpop.f32.mrb[0].mxu0
    %v2002 = vpop.f32.mrb[0].mxu0
    %2003 = vdwg.mxu0
    %v2004 = vpack.c.b16 %v1943, %v1943
    %2005 = vrot.lane.b32.xlu0 %v2004, 32
    %v2006 = vpop.permute.xlu0 %2005
    %v2007 = vpack.c.b16 %v1947, %v1947
    %2008 = vrot.lane.b32.xlu0 %v2007, 32
    %v2009 = vpop.permute.xlu0 %2008
    %v2011 = vsel %vm94, %v2006, 0
    %v2014 = vsel %vm94, %v2009, 0
    %2016 = vmatprep.subr.bf16.mxu0 0
    %2017 = vmatpush1.bf16.xpose.msra.mxu0 %v2014
    %2018 = vmatprep.subr.bf16.mxu0 0
    %2019 = vmatpush1.bf16.xpose.msra.mxu0 0
    %2020 = vmatprep.subr.bf16.mxu0 0
    %2021 = vmatpush1.bf16.xpose.msra.mxu0 0
    %2022 = vmatprep.subr.bf16.mxu0 0
    %2023 = vmatpush1.bf16.xpose.msra.mxu0 0
    %2024 = vmatprep.subr.bf16.mxu0 0
    %2025 = vmatpush1.bf16.xpose.msra.mxu0 0
    %2026 = vmatprep.subr.bf16.mxu0 0
    %2027 = vmatpush1.bf16.xpose.msra.mxu0 0
    %2028 = vmatprep.subr.bf16.mxu0 0
    %2029 = vmatpush1.bf16.xpose.msra.mxu0 0
    %2030 = vmatprep.subr.bf16.mxu0 0
    %2031 = vmatpush1.bf16.xpose.msra.mxu0 0
    %2032 = vmatprep.subr.bf16.mxu0 0
    %2033 = vmatpush1.bf16.xpose.msra.mxu0 0
    %2034 = vmatprep.subr.bf16.mxu0 0
    %2035 = vmatpush1.bf16.xpose.msra.mxu0 0
    %2036 = vmatprep.subr.bf16.mxu0 0
    %2037 = vmatpush1.bf16.xpose.msra.mxu0 0
    %2038 = vmatprep.subr.bf16.mxu0 0
    %2039 = vmatpush1.bf16.xpose.msra.mxu0 0
    %2040 = vmatprep.subr.bf16.mxu0 0
    %2041 = vmatpush1.bf16.xpose.msra.mxu0 0
    %2042 = vmatprep.subr.bf16.mxu0 0
    %2043 = vmatpush1.bf16.xpose.msra.mxu0 0
    %2044 = vmatprep.subr.bf16.mxu0 0
    %2045 = vmatpush1.bf16.xpose.msra.mxu0 0
    %2046 = vmatprep.subr.bf16.mxu0 0
    %2047 = vmatpush1.bf16.xpose.msra.mxu0 0
    %2048 = vmatprep.mubr.bf16.mxu0 0
    %2049 = vmatmul.mubr.bf16.gmra.mrb[0].mxu0 %v2011
    %v2050 = vpop.f32.mrb[0].mxu0
    %v2051 = vadd.f32 0.0, %v2050
    %v2052 = vpop.f32.mrb[0].mxu0
    %v2053 = vpop.f32.mrb[0].mxu0
    %v2054 = vpop.f32.mrb[0].mxu0
    %2055 = vdwg.mxu0
    %v2056 = vsel %vm349, %v1999, -inf
    %2057 = vmax.xlane.f32.xlu0 %v2056
    %v2058 = vpop.xlane.xlu0 %2057
    %v2059 = vsel %vm349, %v2051, -inf
    %2060 = vmax.xlane.f32.xlu0 %v2059
    %v2061 = vpop.xlane.xlu0 %2060
    %v2062 = vsub.f32 %v1999, %v2058
    %v2063 = vsub.f32 %v2051, %v2061
    %v2064 = vmul.f32 %v2062, 1.442695
    %v2065 = vpow.pop %v2064
    %v2066 = vmul.f32 %v2063, 1.442695
    %v2067 = vpow.pop %v2066
    %v2068 = vsel %vm349, %v2065, 0.0
    %2069 = vadd.xlane.f32.xlu0 %v2068
    %v2070 = vpop.xlane.xlu0 %2069
    %v2071 = vsel %vm349, %v2067, 0.0
    %2072 = vadd.xlane.f32.xlu0 %v2071
    %v2073 = vpop.xlane.xlu0 %2072
    %v2074 = vrcp.pop %v2070
    %v2075 = vrcp.pop %v2073
    %v2076 = vmul.f32 %v2065, %v2074
    %v2077 = vmul.f32 %v2067, %v2075
    %v2078 = vpack.c.bf16 %v2076, %v2076
    %v2079 = vpack.c.bf16 %v2077, %v2077
    %v2080 = vpack.c.b16 %v1950, %v1950
    %2081 = vrot.lane.b32.xlu0 %v2080, 32
    %v2082 = vpop.permute.xlu0 %2081
    %v2084 = vsel %vm349, %v2078, 0
    %v2087 = vsel %vm377, %v2082, 0
    %2089 = vmatprep.subr.bf16.mxu0 0
    %2090 = vmatpush1.bf16.msra.mxu0 %v2087
    %2091 = vmatprep.subr.bf16.mxu0 0
    %2092 = vmatpush1.bf16.msra.mxu0 0
    %2093 = vmatprep.subr.bf16.mxu0 0
    %2094 = vmatpush1.bf16.msra.mxu0 0
    %2095 = vmatprep.subr.bf16.mxu0 0
    %2096 = vmatpush1.bf16.msra.mxu0 0
    %2097 = vmatprep.subr.bf16.mxu0 0
    %2098 = vmatpush1.bf16.msra.mxu0 0
    %2099 = vmatprep.subr.bf16.mxu0 0
    %2100 = vmatpush1.bf16.msra.mxu0 0
    %2101 = vmatprep.subr.bf16.mxu0 0
    %2102 = vmatpush1.bf16.msra.mxu0 0
    %2103 = vmatprep.subr.bf16.mxu0 0
    %2104 = vmatpush1.bf16.msra.mxu0 0
    %2105 = vmatprep.subr.bf16.mxu0 0
    %2106 = vmatpush1.bf16.msra.mxu0 0
    %2107 = vmatprep.subr.bf16.mxu0 0
    %2108 = vmatpush1.bf16.msra.mxu0 0
    %2109 = vmatprep.subr.bf16.mxu0 0
    %2110 = vmatpush1.bf16.msra.mxu0 0
    %2111 = vmatprep.subr.bf16.mxu0 0
    %2112 = vmatpush1.bf16.msra.mxu0 0
    %2113 = vmatprep.subr.bf16.mxu0 0
    %2114 = vmatpush1.bf16.msra.mxu0 0
    %2115 = vmatprep.subr.bf16.mxu0 0
    %2116 = vmatpush1.bf16.msra.mxu0 0
    %2117 = vmatprep.subr.bf16.mxu0 0
    %2118 = vmatpush1.bf16.msra.mxu0 0
    %2119 = vmatprep.subr.bf16.mxu0 0
    %2120 = vmatpush1.bf16.msra.mxu0 0
    %2121 = vmatprep.mubr.bf16.mxu0 0
    %2122 = vmatmul.mubr.bf16.gmra.mrb[0].mxu0 %v2084
    %v2123 = vpop.f32.mrb[0].mxu0
    %v2124 = vadd.f32 0.0, %v2123
    %v2125 = vpop.f32.mrb[0].mxu0
    %v2126 = vpop.f32.mrb[0].mxu0
    %v2127 = vpop.f32.mrb[0].mxu0
    %2128 = vdwg.mxu0
    %v2129 = vpack.c.b16 %v1951, %v1951
    %2130 = vrot.lane.b32.xlu0 %v2129, 32
    %v2131 = vpop.permute.xlu0 %2130
    %v2133 = vsel %vm349, %v2079, 0
    %v2136 = vsel %vm377, %v2131, 0
    %2138 = vmatprep.subr.bf16.mxu0 0
    %2139 = vmatpush1.bf16.msra.mxu0 %v2136
    %2140 = vmatprep.subr.bf16.mxu0 0
    %2141 = vmatpush1.bf16.msra.mxu0 0
    %2142 = vmatprep.subr.bf16.mxu0 0
    %2143 = vmatpush1.bf16.msra.mxu0 0
    %2144 = vmatprep.subr.bf16.mxu0 0
    %2145 = vmatpush1.bf16.msra.mxu0 0
    %2146 = vmatprep.subr.bf16.mxu0 0
    %2147 = vmatpush1.bf16.msra.mxu0 0
    %2148 = vmatprep.subr.bf16.mxu0 0
    %2149 = vmatpush1.bf16.msra.mxu0 0
    %2150 = vmatprep.subr.bf16.mxu0 0
    %2151 = vmatpush1.bf16.msra.mxu0 0
    %2152 = vmatprep.subr.bf16.mxu0 0
    %2153 = vmatpush1.bf16.msra.mxu0 0
    %2154 = vmatprep.subr.bf16.mxu0 0
    %2155 = vmatpush1.bf16.msra.mxu0 0
    %2156 = vmatprep.subr.bf16.mxu0 0
    %2157 = vmatpush1.bf16.msra.mxu0 0
    %2158 = vmatprep.subr.bf16.mxu0 0
    %2159 = vmatpush1.bf16.msra.mxu0 0
    %2160 = vmatprep.subr.bf16.mxu0 0
    %2161 = vmatpush1.bf16.msra.mxu0 0
    %2162 = vmatprep.subr.bf16.mxu0 0
    %2163 = vmatpush1.bf16.msra.mxu0 0
    %2164 = vmatprep.subr.bf16.mxu0 0
    %2165 = vmatpush1.bf16.msra.mxu0 0
    %2166 = vmatprep.subr.bf16.mxu0 0
    %2167 = vmatpush1.bf16.msra.mxu0 0
    %2168 = vmatprep.subr.bf16.mxu0 0
    %2169 = vmatpush1.bf16.msra.mxu0 0
    %2170 = vmatprep.mubr.bf16.mxu0 0
    %2171 = vmatmul.mubr.bf16.gmra.mrb[0].mxu0 %v2133
    %v2172 = vpop.f32.mrb[0].mxu0
    %v2173 = vadd.f32 0.0, %v2172
    %v2174 = vpop.f32.mrb[0].mxu0
    %v2175 = vpop.f32.mrb[0].mxu0
    %v2176 = vpop.f32.mrb[0].mxu0
    %2177 = vdwg.mxu0
    %2180 = vrot.lane.b32.xlu0 %v2124, 96
    %v2181 = vpop.permute.xlu0 %2180
    %2182 = vrot.lane.b32.xlu0 %v2173, 96
    %v2183 = vpop.permute.xlu0 %2182
    %2186 = vst.msk [vmem:[#allocation3 + $0x8] sm:$0xff] %vm1213, %v2181
    %2187 = vst.msk [vmem:[#allocation3 + $0x18] sm:$0xff] %vm1213, %v2183
    %v2188 = vld [vmem:[#allocation3] sm:$0xff]
    %v2189 = vld [vmem:[#allocation3 + $0x8] sm:$0xff]
    %v2190 = vld [vmem:[#allocation3 + $0x10] sm:$0xff]
    %v2191 = vld [vmem:[#allocation3 + $0x18] sm:$0xff]
    %v2192 = vpack.c.bf16 %v2190, %v2188
    %v2193 = vpack.c.bf16 %v2191, %v2189
    %v2194 = vld [vmem:[%s2] sm:$0xf]
    %v2195 = vld [vmem:[%s2 + $0x4] sm:$0xf]
    %v2196 = vld [vmem:[%s2 + $0x8] sm:$0xf]
    %v2197 = vld [vmem:[%s2 + $0xc] sm:$0xf]
    %v2198 = vld [vmem:[%s2 + $0x10] sm:$0xf]
    %v2199 = vld [vmem:[%s2 + $0x14] sm:$0xf]
    %v2200 = vld [vmem:[%s2 + $0x18] sm:$0xf]
    %v2201 = vld [vmem:[%s2 + $0x1c] sm:$0xf]
    %v2202 = vld [vmem:[%s2 + $0x20] sm:$0xf]
    %v2203 = vld [vmem:[%s2 + $0x24] sm:$0xf]
    %v2204 = vld [vmem:[%s2 + $0x28] sm:$0xf]
    %v2205 = vld [vmem:[%s2 + $0x2c] sm:$0xf]
    %v2206 = vld [vmem:[%s2 + $0x30] sm:$0xf]
    %v2207 = vld [vmem:[%s2 + $0x34] sm:$0xf]
    %v2208 = vld [vmem:[%s2 + $0x38] sm:$0xf]
    %v2209 = vld [vmem:[%s2 + $0x3c] sm:$0xf]
    %v2210 = vld [vmem:[%s2 + $0x40] sm:$0xf]
    %v2211 = vld [vmem:[%s2 + $0x44] sm:$0xf]
    %v2212 = vld [vmem:[%s2 + $0x48] sm:$0xf]
    %v2213 = vld [vmem:[%s2 + $0x4c] sm:$0xf]
    %v2214 = vld [vmem:[%s2 + $0x50] sm:$0xf]
    %v2215 = vld [vmem:[%s2 + $0x54] sm:$0xf]
    %v2216 = vld [vmem:[%s2 + $0x58] sm:$0xf]
    %v2217 = vld [vmem:[%s2 + $0x5c] sm:$0xf]
    %v2218 = vld [vmem:[%s2 + $0x60] sm:$0xf]
    %v2219 = vld [vmem:[%s2 + $0x64] sm:$0xf]
    %v2220 = vld [vmem:[%s2 + $0x68] sm:$0xf]
    %v2221 = vld [vmem:[%s2 + $0x6c] sm:$0xf]
    %v2222 = vld [vmem:[%s2 + $0x70] sm:$0xf]
    %v2223 = vld [vmem:[%s2 + $0x74] sm:$0xf]
    %v2224 = vld [vmem:[%s2 + $0x78] sm:$0xf]
    %v2225 = vld [vmem:[%s2 + $0x7c] sm:$0xf]
    %v2226 = vld [vmem:[%s3] sm:$0x1]
    %v2228 = vlaneseq
    %v2229 = vshrl.u32 %v2228, 7
    %v2230 = vsub.s32 0, %v2229
    %v2231 = vrot.slane %v2226, %v2230
    %v2265 = vunpack.c.l.b16 %v2194
    %v2266 = vunpack.c.l.b16 %v2195
    %v2267 = vunpack.c.l.b16 %v2196
    %v2268 = vunpack.c.l.b16 %v2197
    %v2269 = vunpack.c.l.b16 %v2198
    %v2270 = vunpack.c.l.b16 %v2199
    %v2271 = vunpack.c.l.b16 %v2200
    %v2272 = vunpack.c.l.b16 %v2201
    %v2273 = vunpack.c.l.b16 %v2202
    %v2274 = vunpack.c.l.b16 %v2203
    %v2275 = vunpack.c.l.b16 %v2204
    %v2276 = vunpack.c.l.b16 %v2205
    %v2277 = vunpack.c.l.b16 %v2206
    %v2278 = vunpack.c.l.b16 %v2207
    %v2279 = vunpack.c.l.b16 %v2208
    %v2280 = vunpack.c.l.b16 %v2209
    %v2281 = vunpack.c.l.b16 %v2210
    %v2282 = vunpack.c.l.b16 %v2211
    %v2283 = vunpack.c.l.b16 %v2212
    %v2284 = vunpack.c.l.b16 %v2213
    %v2285 = vunpack.c.l.b16 %v2214
    %v2286 = vunpack.c.l.b16 %v2215
    %v2287 = vunpack.c.l.b16 %v2216
    %v2288 = vunpack.c.l.b16 %v2217
    %v2289 = vunpack.c.l.b16 %v2218
    %v2290 = vunpack.c.l.b16 %v2219
    %v2291 = vunpack.c.l.b16 %v2220
    %v2292 = vunpack.c.l.b16 %v2221
    %v2293 = vunpack.c.l.b16 %v2222
    %v2294 = vunpack.c.l.b16 %v2223
    %v2295 = vunpack.c.l.b16 %v2224
    %v2296 = vunpack.c.l.b16 %v2225
    %v2297 = vpack.c.b16 %v2266, %v2265
    %v2298 = vpack.c.b16 %v2268, %v2267
    %v2299 = vpack.c.b16 %v2270, %v2269
    %v2300 = vpack.c.b16 %v2272, %v2271
    %v2301 = vpack.c.b16 %v2274, %v2273
    %v2302 = vpack.c.b16 %v2276, %v2275
    %v2303 = vpack.c.b16 %v2278, %v2277
    %v2304 = vpack.c.b16 %v2280, %v2279
    %v2305 = vpack.c.b16 %v2282, %v2281
    %v2306 = vpack.c.b16 %v2284, %v2283
    %v2307 = vpack.c.b16 %v2286, %v2285
    %v2308 = vpack.c.b16 %v2288, %v2287
    %v2309 = vpack.c.b16 %v2290, %v2289
    %v2310 = vpack.c.b16 %v2292, %v2291
    %v2311 = vpack.c.b16 %v2294, %v2293
    %v2312 = vpack.c.b16 %v2296, %v2295
    %2329 = vmatprep.subr.bf16.mxu0 0
    %2330 = vmatpush1.bf16.msra.mxu0 %v2297
    %2331 = vmatprep.subr.bf16.mxu0 0
    %2332 = vmatpush1.bf16.msra.mxu0 %v2298
    %2333 = vmatprep.subr.bf16.mxu0 0
    %2334 = vmatpush1.bf16.msra.mxu0 %v2299
    %2335 = vmatprep.subr.bf16.mxu0 0
    %2336 = vmatpush1.bf16.msra.mxu0 %v2300
    %2337 = vmatprep.subr.bf16.mxu0 0
    %2338 = vmatpush1.bf16.msra.mxu0 %v2301
    %2339 = vmatprep.subr.bf16.mxu0 0
    %2340 = vmatpush1.bf16.msra.mxu0 %v2302
    %2341 = vmatprep.subr.bf16.mxu0 0
    %2342 = vmatpush1.bf16.msra.mxu0 %v2303
    %2343 = vmatprep.subr.bf16.mxu0 0
    %2344 = vmatpush1.bf16.msra.mxu0 %v2304
    %2345 = vmatprep.subr.bf16.mxu0 0
    %2346 = vmatpush1.bf16.msra.mxu0 %v2305
    %2347 = vmatprep.subr.bf16.mxu0 0
    %2348 = vmatpush1.bf16.msra.mxu0 %v2306
    %2349 = vmatprep.subr.bf16.mxu0 0
    %2350 = vmatpush1.bf16.msra.mxu0 %v2307
    %2351 = vmatprep.subr.bf16.mxu0 0
    %2352 = vmatpush1.bf16.msra.mxu0 %v2308
    %2353 = vmatprep.subr.bf16.mxu0 0
    %2354 = vmatpush1.bf16.msra.mxu0 %v2309
    %2355 = vmatprep.subr.bf16.mxu0 0
    %2356 = vmatpush1.bf16.msra.mxu0 %v2310
    %2357 = vmatprep.subr.bf16.mxu0 0
    %2358 = vmatpush1.bf16.msra.mxu0 %v2311
    %2359 = vmatprep.subr.bf16.mxu0 0
    %2360 = vmatpush1.bf16.msra.mxu0 %v2312
    %2361 = vmatprep.mubr.bf16.mxu0 %v2193
    %2362 = vmatmul.mubr.bf16.gmra.mrb[0].mxu0 %v2192
    %v2363 = vpop.f32.mrb[0].mxu0
    %v2364 = vadd.f32 %v2231, %v2363
    %v2365 = vpop.f32.mrb[0].mxu0
    %v2366 = vpop.f32.mrb[0].mxu0
    %v2367 = vadd.f32 %v2231, %v2366
    %v2368 = vpop.f32.mrb[0].mxu0
    %2369 = vdwg.mxu0
    %2370 = vst.msk [vmem:[#allocation4] sm:$0xff] %vm94, %v2364
    %2371 = vst.msk [vmem:[#allocation4 + $0x8] sm:$0xff] %vm94, %v2367
    // Predicated region
    $region18: #{tpu_custom_call.1} parent=1 // pred_check
      _
    $region19: #{tpu_custom_call.1} parent=1 // pred_check_branch
      %2373 = sbr.rel (0) target = $region21
    $region20: #{tpu_custom_call.1} parent=1 // pred_region
      %s2375 = ssub.s32 256, 256
      %2376 = vsyncadd [#allocation5], %s2375
      %s2377 = sshll.u32 [#allocation4], 4
      %s2378 = int_to_ptr.vmem [resolvable:$true] %s2377
      %2383 = dma.vmem_to_hbm [thread:$0]  %s2378, 256, %s4, [#allocation5], 128, 128, 8
    $region21: #{tpu_custom_call.1} parent=1 // pred_fallthru
      _
    // Predicated region
    $region22: #{tpu_custom_call.1} parent=1 // pred_check
      _
    $region23: #{tpu_custom_call.1} parent=1 // pred_check_branch
      %2385 = sbr.rel (0) target = $region25
    $region24: #{tpu_custom_call.1} parent=1 // pred_region
      %2386 = dma.done [#allocation5], 256
    $region25: #{tpu_custom_call.1} parent=1 // pred_fallthru
      _
    %2387 = vsyncpa [#allocation5], 1

</llo_original>
